<compile_context>
chip_gen: v7x
topology: tpu7x:2x2x1
jax: 0.10.0
libtpu: 0.0.40
codegen_flags: <defaults>
</compile_context>

<pallas_src>
import jax
import jax.numpy as jnp
from jax.experimental import pallas as pl
from jax.experimental.pallas import tpu as pltpu


# ----------------------------- model dims (small) -----------------------------
VOCAB = 16
EMBED = 32
HIDDEN = 32
SEQ_LEN = 8
BATCH = 2
LN_EPS = 1e-5

H4 = 4 * HIDDEN          # 128: gate width / lane-padded output width
FUSE_N = 8 * HIDDEN      # 256: fused RHS lane width (layer-1 gates | layer-0 rec)
K_FUSE = 72              # fused contraction: 32 (h0) + 32 (h1) + 1 (ones) pad->72

# Row offsets inside the packed (SLAB_ROWS, 256) weight slab (all 8-aligned).
_R_FUSED = 0             # (72, 256)  [[W_ih1 | W_hh0],[W_hh1 | 0],[b1 | 0],0]
_R_WFC = 72              # (32, 256)  ln-folded fc weight in lanes 0:VOCAB
_R_BFC = 104             # (1, 256)   ln-folded fc bias   in lanes 0:VOCAB
SLAB_ROWS = 112


# --------------------------------- kernel ------------------------------------
def music_rnn_kernel(xproj_ref, slab_ref, out_ref, h_all_scr, lhs_scr):
    """xproj_ref: (T*B, 128) time-major precomputed layer-0 input projection
    (emb@W_ih0 + pos@W_ih0 + b0); slab_ref: (112, 256) packed weights;
    out_ref: (T*B, 128) lane-padded logits (first VOCAB lanes valid);
    h_all_scr: (T*B, H) VMEM scratch; lhs_scr: (B, 72) VMEM scratch."""
    H = HIDDEN
    B = BATCH
    T = SEQ_LEN
    f32 = jnp.float32

    # Static, aligned views into the packed weight slab (single DMA'd input).
    w_fused = slab_ref[_R_FUSED:_R_FUSED + K_FUSE, :]        # (72, 256)
    w_fc = slab_ref[_R_WFC:_R_WFC + H, 0:H4]                 # (32, 128)
    b_fc = slab_ref[_R_BFC:_R_BFC + 1, 0:H4]                 # (1, 128)

    # Hoisted gate-activation constants: sigmoid(x) = 0.5*tanh(0.5*x) + 0.5,
    # so every 128-lane gate vector needs exactly ONE EUP tanh.  g-gate lanes
    # (2H:3H) keep scale=1 / offset=0 (plain tanh).
    lane = jax.lax.broadcasted_iota(jnp.int32, (B, H4), 1)
    is_g = (lane >= 2 * H) & (lane < 3 * H)
    scale = jnp.where(is_g, 1.0, 0.5).astype(f32)            # pre AND post mul
    offset = jnp.where(is_g, 0.0, 0.5).astype(f32)

    def cell(gates, c_prev):
        act = jnp.tanh(gates * scale) * scale + offset
        i_g = act[:, 0 * H:1 * H]
        f_g = act[:, 1 * H:2 * H]
        g_g = act[:, 2 * H:3 * H]
        o_g = act[:, 3 * H:4 * H]
        c_new = f_g * c_prev + i_g * g_g
        h_new = o_g * jnp.tanh(c_new)
        return h_new, c_new

    # LHS staging buffer [h0(t) | h1(t-1) | 1 | 0...]; the ones-lane folds b1
    # into the fused matmul.  h0/h1 start at zero, lane 2H holds the 1.
    k_lane = jax.lax.broadcasted_iota(jnp.int32, (B, K_FUSE), 1)
    lhs_scr[...] = jnp.where(k_lane == 2 * H, 1.0, 0.0).astype(f32)

    c0 = jnp.zeros((B, H), f32)
    c1 = jnp.zeros((B, H), f32)

    # Step-0 layer-0 cell: h0_prev == 0, so gates are just the precomputed
    # input projection (already includes b0).
    h0, c0 = cell(xproj_ref[0:B, :], c0)

    # Skewed recurrence, fully unrolled (T=8 static): one (B,72)@(72,256) MXU
    # op per step produces BOTH layer-1(t) gates (lanes 0:128, bias folded)
    # and the layer-0 recurrent term for step t+1 (lanes 128:256).
    for t in range(T):
        lhs_scr[:, 0:H] = h0                                  # h0(t)
        fused = jnp.dot(lhs_scr[...], w_fused, preferred_element_type=f32)
        g1 = fused[:, 0:H4]                                   # layer-1 gates(t)
        rec0 = fused[:, H4:2 * H4]                            # h0(t) @ W_hh0

        # Layer-1 cell at step t: off the critical path (only feeds next dot
        # through lhs lanes H:2H, not through the layer-0 chain).
        h1, c1 = cell(g1, c1)
        h_all_scr[t * B:(t + 1) * B, :] = h1
        lhs_scr[:, H:2 * H] = h1                              # h1(t) for t+1

        # Layer-0 cell at step t+1: the serial chain feeding the next dot.
        if t + 1 < T:
            g0 = xproj_ref[(t + 1) * B:(t + 2) * B, :] + rec0
            h0, c0 = cell(g0, c0)

    # Epilogue once for all timesteps: LayerNorm (affine folded into fc)
    # + fc projection into a lane-dense (T*B, 128) slab.
    h_all = h_all_scr[...]                                    # (T*B, H)
    mean = jnp.mean(h_all, axis=-1, keepdims=True)
    var = jnp.mean((h_all - mean) ** 2, axis=-1, keepdims=True)
    y = (h_all - mean) * jax.lax.rsqrt(var + LN_EPS)
    out_ref[...] = jnp.dot(y, w_fc, preferred_element_type=f32) + b_fc


# -------------------------------- wrapper -------------------------------------
def _pack_weight_slab(p):
    """Fold LayerNorm affine into fc and pack the fused recurrent RHS plus fc
    into one (112, 256) float32 slab (each component 8-row aligned)."""
    H = HIDDEN
    w_fc_fold = p["ln_w"][:, None] * p["w_fc"]                # (H, V)
    b_fc_fold = p["b_fc"] + p["ln_b"] @ p["w_fc"]             # (V,)

    slab = jnp.zeros((SLAB_ROWS, FUSE_N), jnp.float32)
    # Fused recurrent RHS: [[W_ih1 | W_hh0], [W_hh1 | 0], [b1 | 0], zeros]
    slab = slab.at[0:H, 0:H4].set(p["w_ih1"])
    slab = slab.at[0:H, H4:2 * H4].set(p["w_hh0"])
    slab = slab.at[H:2 * H, 0:H4].set(p["w_hh1"])
    slab = slab.at[2 * H, 0:H4].set(p["b1"])
    # LayerNorm-folded fc, lane-padded to 128 (stored in lanes 0:VOCAB).
    slab = slab.at[_R_WFC:_R_WFC + H, 0:VOCAB].set(w_fc_fold)
    slab = slab.at[_R_BFC, 0:VOCAB].set(b_fc_fold)
    return slab


def music_rnn_forward(x_ids, params):
    """x_ids: int32 (B, T) token ids. Returns logits (B, T, V) float32."""
    B, T = x_ids.shape

    # Glue (fuses into the XLA embedding gathers): precompose the layer-0
    # input-projection tables and gather/add, so the kernel receives a
    # lane-dense (T*B, 128) xproj = (tok_emb + pos_emb) @ W_ih0 + b0.
    tok_tab = params["embedding"] @ params["w_ih0"]           # (V, 4H)
    pos_tab = params["position_embed"] @ params["w_ih0"]      # (T, 4H)
    positions = jnp.arange(T, dtype=jnp.int32)
    xproj = tok_tab[x_ids] + pos_tab[positions][None, :, :] + params["b0"]
    xproj2d = jnp.transpose(xproj, (1, 0, 2)).reshape(T * B, H4).astype(jnp.float32)

    slab = _pack_weight_slab(params)

    out = pl.pallas_call(
        music_rnn_kernel,
        out_shape=jax.ShapeDtypeStruct((T * B, H4), jnp.float32),
        in_specs=[
            pl.BlockSpec(memory_space=pltpu.MemorySpace.VMEM),
            pl.BlockSpec(memory_space=pltpu.MemorySpace.VMEM),
        ],
        out_specs=pl.BlockSpec(memory_space=pltpu.MemorySpace.VMEM),
        scratch_shapes=[
            pltpu.VMEM((T * B, HIDDEN), jnp.float32),   # collected h1 states
            pltpu.VMEM((B, K_FUSE), jnp.float32),       # fused-matmul LHS
        ],
    )(xproj2d, slab)

    logits_tm = out[:, :VOCAB].reshape(T, B, VOCAB)           # time-major
    return jnp.transpose(logits_tm, (1, 0, 2))                # (B, T, V)


# ------------------------ deterministic parameter init ------------------------
def init_params(key):
    ks = jax.random.split(key, 14)
    s = 0.1
    G4 = 4 * HIDDEN
    return {
        "embedding": s * jax.random.normal(ks[0], (VOCAB, EMBED), jnp.float32),
        "position_embed": s * jax.random.normal(ks[1], (SEQ_LEN, EMBED), jnp.float32),
        # LSTM weights stored pre-transposed: x @ W_ih^T -> x @ w_ih0
        "w_ih0": s * jax.random.normal(ks[2], (EMBED, G4), jnp.float32),
        "w_hh0": s * jax.random.normal(ks[3], (HIDDEN, G4), jnp.float32),
        "b0": s * jax.random.normal(ks[4], (G4,), jnp.float32),   # b_ih0 + b_hh0
        "w_ih1": s * jax.random.normal(ks[5], (HIDDEN, G4), jnp.float32),
        "w_hh1": s * jax.random.normal(ks[6], (HIDDEN, G4), jnp.float32),
        "b1": s * jax.random.normal(ks[7], (G4,), jnp.float32),   # b_ih1 + b_hh1
        "ln_w": 1.0 + s * jax.random.normal(ks[8], (HIDDEN,), jnp.float32),
        "ln_b": s * jax.random.normal(ks[9], (HIDDEN,), jnp.float32),
        "w_fc": s * jax.random.normal(ks[10], (HIDDEN, VOCAB), jnp.float32),
        "b_fc": s * jax.random.normal(ks[11], (VOCAB,), jnp.float32),
    }


# ------------------------------ pure-JAX reference -----------------------------
def reference_forward(x_ids, p):
    B, T = x_ids.shape
    H = HIDDEN
    positions = jnp.arange(T, dtype=jnp.int32)
    emb = p["embedding"][x_ids] + p["position_embed"][positions][None, :, :]  # (B,T,E)

    def cell(carry, x_t, w_ih, w_hh, b):
        h, c = carry
        g = x_t @ w_ih + h @ w_hh + b
        i = jax.nn.sigmoid(g[:, 0 * H:1 * H])
        f = jax.nn.sigmoid(g[:, 1 * H:2 * H])
        gg = jnp.tanh(g[:, 2 * H:3 * H])
        o = jax.nn.sigmoid(g[:, 3 * H:4 * H])
        c = f * c + i * gg
        h = o * jnp.tanh(c)
        return (h, c), h

    def scan_layer(xs, w_ih, w_hh, b):
        init = (jnp.zeros((B, H), jnp.float32), jnp.zeros((B, H), jnp.float32))
        _, hs = jax.lax.scan(lambda cr, x: cell(cr, x, w_ih, w_hh, b), init,
                             jnp.transpose(xs, (1, 0, 2)))
        return jnp.transpose(hs, (1, 0, 2))

    h1 = scan_layer(emb, p["w_ih0"], p["w_hh0"], p["b0"])
    h2 = scan_layer(h1, p["w_ih1"], p["w_hh1"], p["b1"])

    mean = jnp.mean(h2, axis=-1, keepdims=True)
    var = jnp.mean((h2 - mean) ** 2, axis=-1, keepdims=True)
    y = (h2 - mean) / jnp.sqrt(var + LN_EPS)
    y = y * p["ln_w"] + p["ln_b"]
    return y @ p["w_fc"] + p["b_fc"]


# ----------------------------------- main --------------------------------------
if __name__ == "__main__":
    key = jax.random.PRNGKey(0)
    k_param, k_x = jax.random.split(key)
    params = init_params(k_param)
    x_ids = jax.random.randint(k_x, (BATCH, SEQ_LEN), 0, VOCAB, dtype=jnp.int32)

    logits = jax.block_until_ready(music_rnn_forward(x_ids, params))
    ref = jax.block_until_ready(reference_forward(x_ids, params))

    assert logits.shape == (BATCH, SEQ_LEN, VOCAB)
    assert jnp.allclose(logits, ref, atol=3e-4, rtol=1e-3), (
        f"max abs err {jnp.max(jnp.abs(logits - ref))}"
    )
    print("KERNEL_OK")
</pallas_src>

<mosaic_0001>
module attributes {stable_mosaic.version = 11 : i64} {
  func.func @music_rnn_kernel(%arg0: memref<16x128xf32, #tpu.memory_space<vmem>>, %arg1: memref<112x256xf32, #tpu.memory_space<vmem>>, %arg2: memref<16x128xf32, #tpu.memory_space<vmem>>, %arg3: memref<16x32xf32, #tpu.memory_space<vmem>>, %arg4: memref<2x72xf32, #tpu.memory_space<vmem>>) attributes {dimension_semantics = [], scalar_prefetch = 0 : i64, scratch_operands = 2 : i64, tpu.core_type = #tpu.core_type<tc>} {
    %c0 = arith.constant 0 : index
    %c0_0 = arith.constant 0 : index
    %0 = vector.load %arg1[%c0, %c0_0] : memref<112x256xf32, #tpu.memory_space<vmem>>, vector<72x256xf32>
    %c72 = arith.constant 72 : index
    %c0_1 = arith.constant 0 : index
    %1 = vector.load %arg1[%c72, %c0_1] : memref<112x256xf32, #tpu.memory_space<vmem>>, vector<32x128xf32>
    %c104 = arith.constant 104 : index
    %c0_2 = arith.constant 0 : index
    %2 = vector.load %arg1[%c104, %c0_2] : memref<112x256xf32, #tpu.memory_space<vmem>>, vector<1x128xf32>
    %3 = tpu.iota {dimensions = array<i32: 1>} : vector<2x128xi32>
    %c64_i32 = arith.constant 64 : i32
    %4 = vector.broadcast %c64_i32 : i32 to vector<2x128xi32>
    %5 = arith.cmpi sge, %3, %4 : vector<2x128xi32>
    %c96_i32 = arith.constant 96 : i32
    %6 = vector.broadcast %c96_i32 : i32 to vector<2x128xi32>
    %7 = arith.cmpi slt, %3, %6 : vector<2x128xi32>
    %8 = arith.andi %5, %7 : vector<2x128xi1>
    %cst = arith.constant 1.000000e+00 : f32
    %cst_3 = arith.constant 5.000000e-01 : f32
    %9 = vector.broadcast %cst : f32 to vector<2x128xf32>
    %10 = vector.broadcast %cst_3 : f32 to vector<2x128xf32>
    %11 = arith.select %8, %9, %10 : vector<2x128xi1>, vector<2x128xf32>
    %cst_4 = arith.constant 0.000000e+00 : f32
    %cst_5 = arith.constant 5.000000e-01 : f32
    %12 = vector.broadcast %cst_4 : f32 to vector<2x128xf32>
    %13 = vector.broadcast %cst_5 : f32 to vector<2x128xf32>
    %14 = arith.select %8, %12, %13 : vector<2x128xi1>, vector<2x128xf32>
    %15 = tpu.iota {dimensions = array<i32: 1>} : vector<2x72xi32>
    %c64_i32_6 = arith.constant 64 : i32
    %16 = vector.broadcast %c64_i32_6 : i32 to vector<2x72xi32>
    %17 = arith.cmpi eq, %15, %16 : vector<2x72xi32>
    %cst_7 = arith.constant 1.000000e+00 : f32
    %cst_8 = arith.constant 0.000000e+00 : f32
    %18 = vector.broadcast %cst_7 : f32 to vector<2x72xf32>
    %19 = vector.broadcast %cst_8 : f32 to vector<2x72xf32>
    %20 = arith.select %17, %18, %19 : vector<2x72xi1>, vector<2x72xf32>
    %c0_9 = arith.constant 0 : index
    %c0_10 = arith.constant 0 : index
    %21 = vector.load %arg4[%c0_9, %c0_10] : memref<2x72xf32, #tpu.memory_space<vmem>>, vector<2x72xf32>
    tpu.vector_store %arg4[%c0_9, %c0_10], %20 {strides = array<i32>} : memref<2x72xf32, #tpu.memory_space<vmem>>, vector<2x72xf32>,
    %cst_11 = arith.constant 0.000000e+00 : f32
    %22 = vector.broadcast %cst_11 : f32 to vector<2x32xf32>
    %cst_12 = arith.constant 0.000000e+00 : f32
    %23 = vector.broadcast %cst_12 : f32 to vector<2x32xf32>
    %c0_13 = arith.constant 0 : index
    %c0_14 = arith.constant 0 : index
    %24 = vector.load %arg0[%c0_13, %c0_14] : memref<16x128xf32, #tpu.memory_space<vmem>>, vector<2x128xf32>
    %25 = arith.mulf %24, %11 : vector<2x128xf32>
    %26 = math.tanh %25 : vector<2x128xf32>
    %27 = arith.mulf %26, %11 : vector<2x128xf32>
    %28 = arith.addf %27, %14 : vector<2x128xf32>
    %29 = vector.extract_strided_slice %28 {offsets = [0, 0], sizes = [2, 32], strides = [1, 1]} : vector<2x128xf32> to vector<2x32xf32>
    %30 = vector.extract_strided_slice %28 {offsets = [0, 32], sizes = [2, 32], strides = [1, 1]} : vector<2x128xf32> to vector<2x32xf32>
    %31 = vector.extract_strided_slice %28 {offsets = [0, 64], sizes = [2, 32], strides = [1, 1]} : vector<2x128xf32> to vector<2x32xf32>
    %32 = vector.extract_strided_slice %28 {offsets = [0, 96], sizes = [2, 32], strides = [1, 1]} : vector<2x128xf32> to vector<2x32xf32>
    %33 = arith.mulf %30, %22 : vector<2x32xf32>
    %34 = arith.mulf %29, %31 : vector<2x32xf32>
    %35 = arith.addf %33, %34 : vector<2x32xf32>
    %36 = math.tanh %35 : vector<2x32xf32>
    %37 = arith.mulf %32, %36 : vector<2x32xf32>
    %c0_15 = arith.constant 0 : index
    %c0_16 = arith.constant 0 : index
    %38 = vector.load %arg4[%c0_15, %c0_16] : memref<2x72xf32, #tpu.memory_space<vmem>>, vector<2x32xf32>
    tpu.vector_store %arg4[%c0_15, %c0_16], %37 {strides = array<i32>} : memref<2x72xf32, #tpu.memory_space<vmem>>, vector<2x32xf32>,
    %c0_17 = arith.constant 0 : index
    %c0_18 = arith.constant 0 : index
    %39 = vector.load %arg4[%c0_17, %c0_18] : memref<2x72xf32, #tpu.memory_space<vmem>>, vector<2x72xf32>
    %cst_19 = arith.constant dense<0.000000e+00> : vector<2x256xf32>
    %40 = tpu.matmul %39, %0, %cst_19 {dimension_numbers = #tpu.dot_dimension_numbers<[1], [0], [0], [1], [0, 0, 1, 1], [], []>} : vector<2x72xf32>, vector<72x256xf32>, vector<2x256xf32> -> vector<2x256xf32>
    %41 = vector.extract_strided_slice %40 {offsets = [0, 0], sizes = [2, 128], strides = [1, 1]} : vector<2x256xf32> to vector<2x128xf32>
    %42 = vector.extract_strided_slice %40 {offsets = [0, 128], sizes = [2, 128], strides = [1, 1]} : vector<2x256xf32> to vector<2x128xf32>
    %43 = arith.mulf %41, %11 : vector<2x128xf32>
    %44 = math.tanh %43 : vector<2x128xf32>
    %45 = arith.mulf %44, %11 : vector<2x128xf32>
    %46 = arith.addf %45, %14 : vector<2x128xf32>
    %47 = vector.extract_strided_slice %46 {offsets = [0, 0], sizes = [2, 32], strides = [1, 1]} : vector<2x128xf32> to vector<2x32xf32>
    %48 = vector.extract_strided_slice %46 {offsets = [0, 32], sizes = [2, 32], strides = [1, 1]} : vector<2x128xf32> to vector<2x32xf32>
    %49 = vector.extract_strided_slice %46 {offsets = [0, 64], sizes = [2, 32], strides = [1, 1]} : vector<2x128xf32> to vector<2x32xf32>
    %50 = vector.extract_strided_slice %46 {offsets = [0, 96], sizes = [2, 32], strides = [1, 1]} : vector<2x128xf32> to vector<2x32xf32>
    %51 = arith.mulf %48, %23 : vector<2x32xf32>
    %52 = arith.mulf %47, %49 : vector<2x32xf32>
    %53 = arith.addf %51, %52 : vector<2x32xf32>
    %54 = math.tanh %53 : vector<2x32xf32>
    %55 = arith.mulf %50, %54 : vector<2x32xf32>
    %c0_20 = arith.constant 0 : index
    %c0_21 = arith.constant 0 : index
    %56 = vector.load %arg3[%c0_20, %c0_21] : memref<16x32xf32, #tpu.memory_space<vmem>>, vector<2x32xf32>
    tpu.vector_store %arg3[%c0_20, %c0_21], %55 {strides = array<i32>} : memref<16x32xf32, #tpu.memory_space<vmem>>, vector<2x32xf32>,
    %c0_22 = arith.constant 0 : index
    %c32 = arith.constant 32 : index
    %57 = vector.load %arg4[%c0_22, %c32] : memref<2x72xf32, #tpu.memory_space<vmem>>, vector<2x32xf32>
    tpu.vector_store %arg4[%c0_22, %c32], %55 {strides = array<i32>} : memref<2x72xf32, #tpu.memory_space<vmem>>, vector<2x32xf32>,
    %c2 = arith.constant 2 : index
    %c0_23 = arith.constant 0 : index
    %58 = vector.load %arg0[%c2, %c0_23] : memref<16x128xf32, #tpu.memory_space<vmem>>, vector<2x128xf32>
    %59 = arith.addf %58, %42 : vector<2x128xf32>
    %60 = arith.mulf %59, %11 : vector<2x128xf32>
    %61 = math.tanh %60 : vector<2x128xf32>
    %62 = arith.mulf %61, %11 : vector<2x128xf32>
    %63 = arith.addf %62, %14 : vector<2x128xf32>
    %64 = vector.extract_strided_slice %63 {offsets = [0, 0], sizes = [2, 32], strides = [1, 1]} : vector<2x128xf32> to vector<2x32xf32>
    %65 = vector.extract_strided_slice %63 {offsets = [0, 32], sizes = [2, 32], strides = [1, 1]} : vector<2x128xf32> to vector<2x32xf32>
    %66 = vector.extract_strided_slice %63 {offsets = [0, 64], sizes = [2, 32], strides = [1, 1]} : vector<2x128xf32> to vector<2x32xf32>
    %67 = vector.extract_strided_slice %63 {offsets = [0, 96], sizes = [2, 32], strides = [1, 1]} : vector<2x128xf32> to vector<2x32xf32>
    %68 = arith.mulf %65, %35 : vector<2x32xf32>
    %69 = arith.mulf %64, %66 : vector<2x32xf32>
    %70 = arith.addf %68, %69 : vector<2x32xf32>
    %71 = math.tanh %70 : vector<2x32xf32>
    %72 = arith.mulf %67, %71 : vector<2x32xf32>
    %c0_24 = arith.constant 0 : index
    %c0_25 = arith.constant 0 : index
    %73 = vector.load %arg4[%c0_24, %c0_25] : memref<2x72xf32, #tpu.memory_space<vmem>>, vector<2x32xf32>
    tpu.vector_store %arg4[%c0_24, %c0_25], %72 {strides = array<i32>} : memref<2x72xf32, #tpu.memory_space<vmem>>, vector<2x32xf32>,
    %c0_26 = arith.constant 0 : index
    %c0_27 = arith.constant 0 : index
    %74 = vector.load %arg4[%c0_26, %c0_27] : memref<2x72xf32, #tpu.memory_space<vmem>>, vector<2x72xf32>
    %cst_28 = arith.constant dense<0.000000e+00> : vector<2x256xf32>
    %75 = tpu.matmul %74, %0, %cst_28 {dimension_numbers = #tpu.dot_dimension_numbers<[1], [0], [0], [1], [0, 0, 1, 1], [], []>} : vector<2x72xf32>, vector<72x256xf32>, vector<2x256xf32> -> vector<2x256xf32>
    %76 = vector.extract_strided_slice %75 {offsets = [0, 0], sizes = [2, 128], strides = [1, 1]} : vector<2x256xf32> to vector<2x128xf32>
    %77 = vector.extract_strided_slice %75 {offsets = [0, 128], sizes = [2, 128], strides = [1, 1]} : vector<2x256xf32> to vector<2x128xf32>
    %78 = arith.mulf %76, %11 : vector<2x128xf32>
    %79 = math.tanh %78 : vector<2x128xf32>
    %80 = arith.mulf %79, %11 : vector<2x128xf32>
    %81 = arith.addf %80, %14 : vector<2x128xf32>
    %82 = vector.extract_strided_slice %81 {offsets = [0, 0], sizes = [2, 32], strides = [1, 1]} : vector<2x128xf32> to vector<2x32xf32>
    %83 = vector.extract_strided_slice %81 {offsets = [0, 32], sizes = [2, 32], strides = [1, 1]} : vector<2x128xf32> to vector<2x32xf32>
    %84 = vector.extract_strided_slice %81 {offsets = [0, 64], sizes = [2, 32], strides = [1, 1]} : vector<2x128xf32> to vector<2x32xf32>
    %85 = vector.extract_strided_slice %81 {offsets = [0, 96], sizes = [2, 32], strides = [1, 1]} : vector<2x128xf32> to vector<2x32xf32>
    %86 = arith.mulf %83, %53 : vector<2x32xf32>
    %87 = arith.mulf %82, %84 : vector<2x32xf32>
    %88 = arith.addf %86, %87 : vector<2x32xf32>
    %89 = math.tanh %88 : vector<2x32xf32>
    %90 = arith.mulf %85, %89 : vector<2x32xf32>
    %c2_29 = arith.constant 2 : index
    %c0_30 = arith.constant 0 : index
    %91 = vector.load %arg3[%c2_29, %c0_30] : memref<16x32xf32, #tpu.memory_space<vmem>>, vector<2x32xf32>
    tpu.vector_store %arg3[%c2_29, %c0_30], %90 {strides = array<i32>} : memref<16x32xf32, #tpu.memory_space<vmem>>, vector<2x32xf32>,
    %c0_31 = arith.constant 0 : index
    %c32_32 = arith.constant 32 : index
    %92 = vector.load %arg4[%c0_31, %c32_32] : memref<2x72xf32, #tpu.memory_space<vmem>>, vector<2x32xf32>
    tpu.vector_store %arg4[%c0_31, %c32_32], %90 {strides = array<i32>} : memref<2x72xf32, #tpu.memory_space<vmem>>, vector<2x32xf32>,
    %c4 = arith.constant 4 : index
    %c0_33 = arith.constant 0 : index
    %93 = vector.load %arg0[%c4, %c0_33] : memref<16x128xf32, #tpu.memory_space<vmem>>, vector<2x128xf32>
    %94 = arith.addf %93, %77 : vector<2x128xf32>
    %95 = arith.mulf %94, %11 : vector<2x128xf32>
    %96 = math.tanh %95 : vector<2x128xf32>
    %97 = arith.mulf %96, %11 : vector<2x128xf32>
    %98 = arith.addf %97, %14 : vector<2x128xf32>
    %99 = vector.extract_strided_slice %98 {offsets = [0, 0], sizes = [2, 32], strides = [1, 1]} : vector<2x128xf32> to vector<2x32xf32>
    %100 = vector.extract_strided_slice %98 {offsets = [0, 32], sizes = [2, 32], strides = [1, 1]} : vector<2x128xf32> to vector<2x32xf32>
    %101 = vector.extract_strided_slice %98 {offsets = [0, 64], sizes = [2, 32], strides = [1, 1]} : vector<2x128xf32> to vector<2x32xf32>
    %102 = vector.extract_strided_slice %98 {offsets = [0, 96], sizes = [2, 32], strides = [1, 1]} : vector<2x128xf32> to vector<2x32xf32>
    %103 = arith.mulf %100, %70 : vector<2x32xf32>
    %104 = arith.mulf %99, %101 : vector<2x32xf32>
    %105 = arith.addf %103, %104 : vector<2x32xf32>
    %106 = math.tanh %105 : vector<2x32xf32>
    %107 = arith.mulf %102, %106 : vector<2x32xf32>
    %c0_34 = arith.constant 0 : index
    %c0_35 = arith.constant 0 : index
    %108 = vector.load %arg4[%c0_34, %c0_35] : memref<2x72xf32, #tpu.memory_space<vmem>>, vector<2x32xf32>
    tpu.vector_store %arg4[%c0_34, %c0_35], %107 {strides = array<i32>} : memref<2x72xf32, #tpu.memory_space<vmem>>, vector<2x32xf32>,
    %c0_36 = arith.constant 0 : index
    %c0_37 = arith.constant 0 : index
    %109 = vector.load %arg4[%c0_36, %c0_37] : memref<2x72xf32, #tpu.memory_space<vmem>>, vector<2x72xf32>
    %cst_38 = arith.constant dense<0.000000e+00> : vector<2x256xf32>
    %110 = tpu.matmul %109, %0, %cst_38 {dimension_numbers = #tpu.dot_dimension_numbers<[1], [0], [0], [1], [0, 0, 1, 1], [], []>} : vector<2x72xf32>, vector<72x256xf32>, vector<2x256xf32> -> vector<2x256xf32>
    %111 = vector.extract_strided_slice %110 {offsets = [0, 0], sizes = [2, 128], strides = [1, 1]} : vector<2x256xf32> to vector<2x128xf32>
    %112 = vector.extract_strided_slice %110 {offsets = [0, 128], sizes = [2, 128], strides = [1, 1]} : vector<2x256xf32> to vector<2x128xf32>
    %113 = arith.mulf %111, %11 : vector<2x128xf32>
    %114 = math.tanh %113 : vector<2x128xf32>
    %115 = arith.mulf %114, %11 : vector<2x128xf32>
    %116 = arith.addf %115, %14 : vector<2x128xf32>
    %117 = vector.extract_strided_slice %116 {offsets = [0, 0], sizes = [2, 32], strides = [1, 1]} : vector<2x128xf32> to vector<2x32xf32>
    %118 = vector.extract_strided_slice %116 {offsets = [0, 32], sizes = [2, 32], strides = [1, 1]} : vector<2x128xf32> to vector<2x32xf32>
    %119 = vector.extract_strided_slice %116 {offsets = [0, 64], sizes = [2, 32], strides = [1, 1]} : vector<2x128xf32> to vector<2x32xf32>
    %120 = vector.extract_strided_slice %116 {offsets = [0, 96], sizes = [2, 32], strides = [1, 1]} : vector<2x128xf32> to vector<2x32xf32>
    %121 = arith.mulf %118, %88 : vector<2x32xf32>
    %122 = arith.mulf %117, %119 : vector<2x32xf32>
    %123 = arith.addf %121, %122 : vector<2x32xf32>
    %124 = math.tanh %123 : vector<2x32xf32>
    %125 = arith.mulf %120, %124 : vector<2x32xf32>
    %c4_39 = arith.constant 4 : index
    %c0_40 = arith.constant 0 : index
    %126 = vector.load %arg3[%c4_39, %c0_40] : memref<16x32xf32, #tpu.memory_space<vmem>>, vector<2x32xf32>
    tpu.vector_store %arg3[%c4_39, %c0_40], %125 {strides = array<i32>} : memref<16x32xf32, #tpu.memory_space<vmem>>, vector<2x32xf32>,
    %c0_41 = arith.constant 0 : index
    %c32_42 = arith.constant 32 : index
    %127 = vector.load %arg4[%c0_41, %c32_42] : memref<2x72xf32, #tpu.memory_space<vmem>>, vector<2x32xf32>
    tpu.vector_store %arg4[%c0_41, %c32_42], %125 {strides = array<i32>} : memref<2x72xf32, #tpu.memory_space<vmem>>, vector<2x32xf32>,
    %c6 = arith.constant 6 : index
    %c0_43 = arith.constant 0 : index
    %128 = vector.load %arg0[%c6, %c0_43] : memref<16x128xf32, #tpu.memory_space<vmem>>, vector<2x128xf32>
    %129 = arith.addf %128, %112 : vector<2x128xf32>
    %130 = arith.mulf %129, %11 : vector<2x128xf32>
    %131 = math.tanh %130 : vector<2x128xf32>
    %132 = arith.mulf %131, %11 : vector<2x128xf32>
    %133 = arith.addf %132, %14 : vector<2x128xf32>
    %134 = vector.extract_strided_slice %133 {offsets = [0, 0], sizes = [2, 32], strides = [1, 1]} : vector<2x128xf32> to vector<2x32xf32>
    %135 = vector.extract_strided_slice %133 {offsets = [0, 32], sizes = [2, 32], strides = [1, 1]} : vector<2x128xf32> to vector<2x32xf32>
    %136 = vector.extract_strided_slice %133 {offsets = [0, 64], sizes = [2, 32], strides = [1, 1]} : vector<2x128xf32> to vector<2x32xf32>
    %137 = vector.extract_strided_slice %133 {offsets = [0, 96], sizes = [2, 32], strides = [1, 1]} : vector<2x128xf32> to vector<2x32xf32>
    %138 = arith.mulf %135, %105 : vector<2x32xf32>
    %139 = arith.mulf %134, %136 : vector<2x32xf32>
    %140 = arith.addf %138, %139 : vector<2x32xf32>
    %141 = math.tanh %140 : vector<2x32xf32>
    %142 = arith.mulf %137, %141 : vector<2x32xf32>
    %c0_44 = arith.constant 0 : index
    %c0_45 = arith.constant 0 : index
    %143 = vector.load %arg4[%c0_44, %c0_45] : memref<2x72xf32, #tpu.memory_space<vmem>>, vector<2x32xf32>
    tpu.vector_store %arg4[%c0_44, %c0_45], %142 {strides = array<i32>} : memref<2x72xf32, #tpu.memory_space<vmem>>, vector<2x32xf32>,
    %c0_46 = arith.constant 0 : index
    %c0_47 = arith.constant 0 : index
    %144 = vector.load %arg4[%c0_46, %c0_47] : memref<2x72xf32, #tpu.memory_space<vmem>>, vector<2x72xf32>
    %cst_48 = arith.constant dense<0.000000e+00> : vector<2x256xf32>
    %145 = tpu.matmul %144, %0, %cst_48 {dimension_numbers = #tpu.dot_dimension_numbers<[1], [0], [0], [1], [0, 0, 1, 1], [], []>} : vector<2x72xf32>, vector<72x256xf32>, vector<2x256xf32> -> vector<2x256xf32>
    %146 = vector.extract_strided_slice %145 {offsets = [0, 0], sizes = [2, 128], strides = [1, 1]} : vector<2x256xf32> to vector<2x128xf32>
    %147 = vector.extract_strided_slice %145 {offsets = [0, 128], sizes = [2, 128], strides = [1, 1]} : vector<2x256xf32> to vector<2x128xf32>
    %148 = arith.mulf %146, %11 : vector<2x128xf32>
    %149 = math.tanh %148 : vector<2x128xf32>
    %150 = arith.mulf %149, %11 : vector<2x128xf32>
    %151 = arith.addf %150, %14 : vector<2x128xf32>
    %152 = vector.extract_strided_slice %151 {offsets = [0, 0], sizes = [2, 32], strides = [1, 1]} : vector<2x128xf32> to vector<2x32xf32>
    %153 = vector.extract_strided_slice %151 {offsets = [0, 32], sizes = [2, 32], strides = [1, 1]} : vector<2x128xf32> to vector<2x32xf32>
    %154 = vector.extract_strided_slice %151 {offsets = [0, 64], sizes = [2, 32], strides = [1, 1]} : vector<2x128xf32> to vector<2x32xf32>
    %155 = vector.extract_strided_slice %151 {offsets = [0, 96], sizes = [2, 32], strides = [1, 1]} : vector<2x128xf32> to vector<2x32xf32>
    %156 = arith.mulf %153, %123 : vector<2x32xf32>
    %157 = arith.mulf %152, %154 : vector<2x32xf32>
    %158 = arith.addf %156, %157 : vector<2x32xf32>
    %159 = math.tanh %158 : vector<2x32xf32>
    %160 = arith.mulf %155, %159 : vector<2x32xf32>
    %c6_49 = arith.constant 6 : index
    %c0_50 = arith.constant 0 : index
    %161 = vector.load %arg3[%c6_49, %c0_50] : memref<16x32xf32, #tpu.memory_space<vmem>>, vector<2x32xf32>
    tpu.vector_store %arg3[%c6_49, %c0_50], %160 {strides = array<i32>} : memref<16x32xf32, #tpu.memory_space<vmem>>, vector<2x32xf32>,
    %c0_51 = arith.constant 0 : index
    %c32_52 = arith.constant 32 : index
    %162 = vector.load %arg4[%c0_51, %c32_52] : memref<2x72xf32, #tpu.memory_space<vmem>>, vector<2x32xf32>
    tpu.vector_store %arg4[%c0_51, %c32_52], %160 {strides = array<i32>} : memref<2x72xf32, #tpu.memory_space<vmem>>, vector<2x32xf32>,
    %c8 = arith.constant 8 : index
    %c0_53 = arith.constant 0 : index
    %163 = vector.load %arg0[%c8, %c0_53] : memref<16x128xf32, #tpu.memory_space<vmem>>, vector<2x128xf32>
    %164 = arith.addf %163, %147 : vector<2x128xf32>
    %165 = arith.mulf %164, %11 : vector<2x128xf32>
    %166 = math.tanh %165 : vector<2x128xf32>
    %167 = arith.mulf %166, %11 : vector<2x128xf32>
    %168 = arith.addf %167, %14 : vector<2x128xf32>
    %169 = vector.extract_strided_slice %168 {offsets = [0, 0], sizes = [2, 32], strides = [1, 1]} : vector<2x128xf32> to vector<2x32xf32>
    %170 = vector.extract_strided_slice %168 {offsets = [0, 32], sizes = [2, 32], strides = [1, 1]} : vector<2x128xf32> to vector<2x32xf32>
    %171 = vector.extract_strided_slice %168 {offsets = [0, 64], sizes = [2, 32], strides = [1, 1]} : vector<2x128xf32> to vector<2x32xf32>
    %172 = vector.extract_strided_slice %168 {offsets = [0, 96], sizes = [2, 32], strides = [1, 1]} : vector<2x128xf32> to vector<2x32xf32>
    %173 = arith.mulf %170, %140 : vector<2x32xf32>
    %174 = arith.mulf %169, %171 : vector<2x32xf32>
    %175 = arith.addf %173, %174 : vector<2x32xf32>
    %176 = math.tanh %175 : vector<2x32xf32>
    %177 = arith.mulf %172, %176 : vector<2x32xf32>
    %c0_54 = arith.constant 0 : index
    %c0_55 = arith.constant 0 : index
    %178 = vector.load %arg4[%c0_54, %c0_55] : memref<2x72xf32, #tpu.memory_space<vmem>>, vector<2x32xf32>
    tpu.vector_store %arg4[%c0_54, %c0_55], %177 {strides = array<i32>} : memref<2x72xf32, #tpu.memory_space<vmem>>, vector<2x32xf32>,
    %c0_56 = arith.constant 0 : index
    %c0_57 = arith.constant 0 : index
    %179 = vector.load %arg4[%c0_56, %c0_57] : memref<2x72xf32, #tpu.memory_space<vmem>>, vector<2x72xf32>
    %cst_58 = arith.constant dense<0.000000e+00> : vector<2x256xf32>
    %180 = tpu.matmul %179, %0, %cst_58 {dimension_numbers = #tpu.dot_dimension_numbers<[1], [0], [0], [1], [0, 0, 1, 1], [], []>} : vector<2x72xf32>, vector<72x256xf32>, vector<2x256xf32> -> vector<2x256xf32>
    %181 = vector.extract_strided_slice %180 {offsets = [0, 0], sizes = [2, 128], strides = [1, 1]} : vector<2x256xf32> to vector<2x128xf32>
    %182 = vector.extract_strided_slice %180 {offsets = [0, 128], sizes = [2, 128], strides = [1, 1]} : vector<2x256xf32> to vector<2x128xf32>
    %183 = arith.mulf %181, %11 : vector<2x128xf32>
    %184 = math.tanh %183 : vector<2x128xf32>
    %185 = arith.mulf %184, %11 : vector<2x128xf32>
    %186 = arith.addf %185, %14 : vector<2x128xf32>
    %187 = vector.extract_strided_slice %186 {offsets = [0, 0], sizes = [2, 32], strides = [1, 1]} : vector<2x128xf32> to vector<2x32xf32>
    %188 = vector.extract_strided_slice %186 {offsets = [0, 32], sizes = [2, 32], strides = [1, 1]} : vector<2x128xf32> to vector<2x32xf32>
    %189 = vector.extract_strided_slice %186 {offsets = [0, 64], sizes = [2, 32], strides = [1, 1]} : vector<2x128xf32> to vector<2x32xf32>
    %190 = vector.extract_strided_slice %186 {offsets = [0, 96], sizes = [2, 32], strides = [1, 1]} : vector<2x128xf32> to vector<2x32xf32>
    %191 = arith.mulf %188, %158 : vector<2x32xf32>
    %192 = arith.mulf %187, %189 : vector<2x32xf32>
    %193 = arith.addf %191, %192 : vector<2x32xf32>
    %194 = math.tanh %193 : vector<2x32xf32>
    %195 = arith.mulf %190, %194 : vector<2x32xf32>
    %c8_59 = arith.constant 8 : index
    %c0_60 = arith.constant 0 : index
    %196 = vector.load %arg3[%c8_59, %c0_60] : memref<16x32xf32, #tpu.memory_space<vmem>>, vector<2x32xf32>
    tpu.vector_store %arg3[%c8_59, %c0_60], %195 {strides = array<i32>} : memref<16x32xf32, #tpu.memory_space<vmem>>, vector<2x32xf32>,
    %c0_61 = arith.constant 0 : index
    %c32_62 = arith.constant 32 : index
    %197 = vector.load %arg4[%c0_61, %c32_62] : memref<2x72xf32, #tpu.memory_space<vmem>>, vector<2x32xf32>
    tpu.vector_store %arg4[%c0_61, %c32_62], %195 {strides = array<i32>} : memref<2x72xf32, #tpu.memory_space<vmem>>, vector<2x32xf32>,
    %c10 = arith.constant 10 : index
    %c0_63 = arith.constant 0 : index
    %198 = vector.load %arg0[%c10, %c0_63] : memref<16x128xf32, #tpu.memory_space<vmem>>, vector<2x128xf32>
    %199 = arith.addf %198, %182 : vector<2x128xf32>
    %200 = arith.mulf %199, %11 : vector<2x128xf32>
    %201 = math.tanh %200 : vector<2x128xf32>
    %202 = arith.mulf %201, %11 : vector<2x128xf32>
    %203 = arith.addf %202, %14 : vector<2x128xf32>
    %204 = vector.extract_strided_slice %203 {offsets = [0, 0], sizes = [2, 32], strides = [1, 1]} : vector<2x128xf32> to vector<2x32xf32>
    %205 = vector.extract_strided_slice %203 {offsets = [0, 32], sizes = [2, 32], strides = [1, 1]} : vector<2x128xf32> to vector<2x32xf32>
    %206 = vector.extract_strided_slice %203 {offsets = [0, 64], sizes = [2, 32], strides = [1, 1]} : vector<2x128xf32> to vector<2x32xf32>
    %207 = vector.extract_strided_slice %203 {offsets = [0, 96], sizes = [2, 32], strides = [1, 1]} : vector<2x128xf32> to vector<2x32xf32>
    %208 = arith.mulf %205, %175 : vector<2x32xf32>
    %209 = arith.mulf %204, %206 : vector<2x32xf32>
    %210 = arith.addf %208, %209 : vector<2x32xf32>
    %211 = math.tanh %210 : vector<2x32xf32>
    %212 = arith.mulf %207, %211 : vector<2x32xf32>
    %c0_64 = arith.constant 0 : index
    %c0_65 = arith.constant 0 : index
    %213 = vector.load %arg4[%c0_64, %c0_65] : memref<2x72xf32, #tpu.memory_space<vmem>>, vector<2x32xf32>
    tpu.vector_store %arg4[%c0_64, %c0_65], %212 {strides = array<i32>} : memref<2x72xf32, #tpu.memory_space<vmem>>, vector<2x32xf32>,
    %c0_66 = arith.constant 0 : index
    %c0_67 = arith.constant 0 : index
    %214 = vector.load %arg4[%c0_66, %c0_67] : memref<2x72xf32, #tpu.memory_space<vmem>>, vector<2x72xf32>
    %cst_68 = arith.constant dense<0.000000e+00> : vector<2x256xf32>
    %215 = tpu.matmul %214, %0, %cst_68 {dimension_numbers = #tpu.dot_dimension_numbers<[1], [0], [0], [1], [0, 0, 1, 1], [], []>} : vector<2x72xf32>, vector<72x256xf32>, vector<2x256xf32> -> vector<2x256xf32>
    %216 = vector.extract_strided_slice %215 {offsets = [0, 0], sizes = [2, 128], strides = [1, 1]} : vector<2x256xf32> to vector<2x128xf32>
    %217 = vector.extract_strided_slice %215 {offsets = [0, 128], sizes = [2, 128], strides = [1, 1]} : vector<2x256xf32> to vector<2x128xf32>
    %218 = arith.mulf %216, %11 : vector<2x128xf32>
    %219 = math.tanh %218 : vector<2x128xf32>
    %220 = arith.mulf %219, %11 : vector<2x128xf32>
    %221 = arith.addf %220, %14 : vector<2x128xf32>
    %222 = vector.extract_strided_slice %221 {offsets = [0, 0], sizes = [2, 32], strides = [1, 1]} : vector<2x128xf32> to vector<2x32xf32>
    %223 = vector.extract_strided_slice %221 {offsets = [0, 32], sizes = [2, 32], strides = [1, 1]} : vector<2x128xf32> to vector<2x32xf32>
    %224 = vector.extract_strided_slice %221 {offsets = [0, 64], sizes = [2, 32], strides = [1, 1]} : vector<2x128xf32> to vector<2x32xf32>
    %225 = vector.extract_strided_slice %221 {offsets = [0, 96], sizes = [2, 32], strides = [1, 1]} : vector<2x128xf32> to vector<2x32xf32>
    %226 = arith.mulf %223, %193 : vector<2x32xf32>
    %227 = arith.mulf %222, %224 : vector<2x32xf32>
    %228 = arith.addf %226, %227 : vector<2x32xf32>
    %229 = math.tanh %228 : vector<2x32xf32>
    %230 = arith.mulf %225, %229 : vector<2x32xf32>
    %c10_69 = arith.constant 10 : index
    %c0_70 = arith.constant 0 : index
    %231 = vector.load %arg3[%c10_69, %c0_70] : memref<16x32xf32, #tpu.memory_space<vmem>>, vector<2x32xf32>
    tpu.vector_store %arg3[%c10_69, %c0_70], %230 {strides = array<i32>} : memref<16x32xf32, #tpu.memory_space<vmem>>, vector<2x32xf32>,
    %c0_71 = arith.constant 0 : index
    %c32_72 = arith.constant 32 : index
    %232 = vector.load %arg4[%c0_71, %c32_72] : memref<2x72xf32, #tpu.memory_space<vmem>>, vector<2x32xf32>
    tpu.vector_store %arg4[%c0_71, %c32_72], %230 {strides = array<i32>} : memref<2x72xf32, #tpu.memory_space<vmem>>, vector<2x32xf32>,
    %c12 = arith.constant 12 : index
    %c0_73 = arith.constant 0 : index
    %233 = vector.load %arg0[%c12, %c0_73] : memref<16x128xf32, #tpu.memory_space<vmem>>, vector<2x128xf32>
    %234 = arith.addf %233, %217 : vector<2x128xf32>
    %235 = arith.mulf %234, %11 : vector<2x128xf32>
    %236 = math.tanh %235 : vector<2x128xf32>
    %237 = arith.mulf %236, %11 : vector<2x128xf32>
    %238 = arith.addf %237, %14 : vector<2x128xf32>
    %239 = vector.extract_strided_slice %238 {offsets = [0, 0], sizes = [2, 32], strides = [1, 1]} : vector<2x128xf32> to vector<2x32xf32>
    %240 = vector.extract_strided_slice %238 {offsets = [0, 32], sizes = [2, 32], strides = [1, 1]} : vector<2x128xf32> to vector<2x32xf32>
    %241 = vector.extract_strided_slice %238 {offsets = [0, 64], sizes = [2, 32], strides = [1, 1]} : vector<2x128xf32> to vector<2x32xf32>
    %242 = vector.extract_strided_slice %238 {offsets = [0, 96], sizes = [2, 32], strides = [1, 1]} : vector<2x128xf32> to vector<2x32xf32>
    %243 = arith.mulf %240, %210 : vector<2x32xf32>
    %244 = arith.mulf %239, %241 : vector<2x32xf32>
    %245 = arith.addf %243, %244 : vector<2x32xf32>
    %246 = math.tanh %245 : vector<2x32xf32>
    %247 = arith.mulf %242, %246 : vector<2x32xf32>
    %c0_74 = arith.constant 0 : index
    %c0_75 = arith.constant 0 : index
    %248 = vector.load %arg4[%c0_74, %c0_75] : memref<2x72xf32, #tpu.memory_space<vmem>>, vector<2x32xf32>
    tpu.vector_store %arg4[%c0_74, %c0_75], %247 {strides = array<i32>} : memref<2x72xf32, #tpu.memory_space<vmem>>, vector<2x32xf32>,
    %c0_76 = arith.constant 0 : index
    %c0_77 = arith.constant 0 : index
    %249 = vector.load %arg4[%c0_76, %c0_77] : memref<2x72xf32, #tpu.memory_space<vmem>>, vector<2x72xf32>
    %cst_78 = arith.constant dense<0.000000e+00> : vector<2x256xf32>
    %250 = tpu.matmul %249, %0, %cst_78 {dimension_numbers = #tpu.dot_dimension_numbers<[1], [0], [0], [1], [0, 0, 1, 1], [], []>} : vector<2x72xf32>, vector<72x256xf32>, vector<2x256xf32> -> vector<2x256xf32>
    %251 = vector.extract_strided_slice %250 {offsets = [0, 0], sizes = [2, 128], strides = [1, 1]} : vector<2x256xf32> to vector<2x128xf32>
    %252 = vector.extract_strided_slice %250 {offsets = [0, 128], sizes = [2, 128], strides = [1, 1]} : vector<2x256xf32> to vector<2x128xf32>
    %253 = arith.mulf %251, %11 : vector<2x128xf32>
    %254 = math.tanh %253 : vector<2x128xf32>
    %255 = arith.mulf %254, %11 : vector<2x128xf32>
    %256 = arith.addf %255, %14 : vector<2x128xf32>
    %257 = vector.extract_strided_slice %256 {offsets = [0, 0], sizes = [2, 32], strides = [1, 1]} : vector<2x128xf32> to vector<2x32xf32>
    %258 = vector.extract_strided_slice %256 {offsets = [0, 32], sizes = [2, 32], strides = [1, 1]} : vector<2x128xf32> to vector<2x32xf32>
    %259 = vector.extract_strided_slice %256 {offsets = [0, 64], sizes = [2, 32], strides = [1, 1]} : vector<2x128xf32> to vector<2x32xf32>
    %260 = vector.extract_strided_slice %256 {offsets = [0, 96], sizes = [2, 32], strides = [1, 1]} : vector<2x128xf32> to vector<2x32xf32>
    %261 = arith.mulf %258, %228 : vector<2x32xf32>
    %262 = arith.mulf %257, %259 : vector<2x32xf32>
    %263 = arith.addf %261, %262 : vector<2x32xf32>
    %264 = math.tanh %263 : vector<2x32xf32>
    %265 = arith.mulf %260, %264 : vector<2x32xf32>
    %c12_79 = arith.constant 12 : index
    %c0_80 = arith.constant 0 : index
    %266 = vector.load %arg3[%c12_79, %c0_80] : memref<16x32xf32, #tpu.memory_space<vmem>>, vector<2x32xf32>
    tpu.vector_store %arg3[%c12_79, %c0_80], %265 {strides = array<i32>} : memref<16x32xf32, #tpu.memory_space<vmem>>, vector<2x32xf32>,
    %c0_81 = arith.constant 0 : index
    %c32_82 = arith.constant 32 : index
    %267 = vector.load %arg4[%c0_81, %c32_82] : memref<2x72xf32, #tpu.memory_space<vmem>>, vector<2x32xf32>
    tpu.vector_store %arg4[%c0_81, %c32_82], %265 {strides = array<i32>} : memref<2x72xf32, #tpu.memory_space<vmem>>, vector<2x32xf32>,
    %c14 = arith.constant 14 : index
    %c0_83 = arith.constant 0 : index
    %268 = vector.load %arg0[%c14, %c0_83] : memref<16x128xf32, #tpu.memory_space<vmem>>, vector<2x128xf32>
    %269 = arith.addf %268, %252 : vector<2x128xf32>
    %270 = arith.mulf %269, %11 : vector<2x128xf32>
    %271 = math.tanh %270 : vector<2x128xf32>
    %272 = arith.mulf %271, %11 : vector<2x128xf32>
    %273 = arith.addf %272, %14 : vector<2x128xf32>
    %274 = vector.extract_strided_slice %273 {offsets = [0, 0], sizes = [2, 32], strides = [1, 1]} : vector<2x128xf32> to vector<2x32xf32>
    %275 = vector.extract_strided_slice %273 {offsets = [0, 32], sizes = [2, 32], strides = [1, 1]} : vector<2x128xf32> to vector<2x32xf32>
    %276 = vector.extract_strided_slice %273 {offsets = [0, 64], sizes = [2, 32], strides = [1, 1]} : vector<2x128xf32> to vector<2x32xf32>
    %277 = vector.extract_strided_slice %273 {offsets = [0, 96], sizes = [2, 32], strides = [1, 1]} : vector<2x128xf32> to vector<2x32xf32>
    %278 = arith.mulf %275, %245 : vector<2x32xf32>
    %279 = arith.mulf %274, %276 : vector<2x32xf32>
    %280 = arith.addf %278, %279 : vector<2x32xf32>
    %281 = math.tanh %280 : vector<2x32xf32>
    %282 = arith.mulf %277, %281 : vector<2x32xf32>
    %c0_84 = arith.constant 0 : index
    %c0_85 = arith.constant 0 : index
    %283 = vector.load %arg4[%c0_84, %c0_85] : memref<2x72xf32, #tpu.memory_space<vmem>>, vector<2x32xf32>
    tpu.vector_store %arg4[%c0_84, %c0_85], %282 {strides = array<i32>} : memref<2x72xf32, #tpu.memory_space<vmem>>, vector<2x32xf32>,
    %c0_86 = arith.constant 0 : index
    %c0_87 = arith.constant 0 : index
    %284 = vector.load %arg4[%c0_86, %c0_87] : memref<2x72xf32, #tpu.memory_space<vmem>>, vector<2x72xf32>
    %cst_88 = arith.constant dense<0.000000e+00> : vector<2x256xf32>
    %285 = tpu.matmul %284, %0, %cst_88 {dimension_numbers = #tpu.dot_dimension_numbers<[1], [0], [0], [1], [0, 0, 1, 1], [], []>} : vector<2x72xf32>, vector<72x256xf32>, vector<2x256xf32> -> vector<2x256xf32>
    %286 = vector.extract_strided_slice %285 {offsets = [0, 0], sizes = [2, 128], strides = [1, 1]} : vector<2x256xf32> to vector<2x128xf32>
    %287 = arith.mulf %286, %11 : vector<2x128xf32>
    %288 = math.tanh %287 : vector<2x128xf32>
    %289 = arith.mulf %288, %11 : vector<2x128xf32>
    %290 = arith.addf %289, %14 : vector<2x128xf32>
    %291 = vector.extract_strided_slice %290 {offsets = [0, 0], sizes = [2, 32], strides = [1, 1]} : vector<2x128xf32> to vector<2x32xf32>
    %292 = vector.extract_strided_slice %290 {offsets = [0, 32], sizes = [2, 32], strides = [1, 1]} : vector<2x128xf32> to vector<2x32xf32>
    %293 = vector.extract_strided_slice %290 {offsets = [0, 64], sizes = [2, 32], strides = [1, 1]} : vector<2x128xf32> to vector<2x32xf32>
    %294 = vector.extract_strided_slice %290 {offsets = [0, 96], sizes = [2, 32], strides = [1, 1]} : vector<2x128xf32> to vector<2x32xf32>
    %295 = arith.mulf %292, %263 : vector<2x32xf32>
    %296 = arith.mulf %291, %293 : vector<2x32xf32>
    %297 = arith.addf %295, %296 : vector<2x32xf32>
    %298 = math.tanh %297 : vector<2x32xf32>
    %299 = arith.mulf %294, %298 : vector<2x32xf32>
    %c14_89 = arith.constant 14 : index
    %c0_90 = arith.constant 0 : index
    %300 = vector.load %arg3[%c14_89, %c0_90] : memref<16x32xf32, #tpu.memory_space<vmem>>, vector<2x32xf32>
    tpu.vector_store %arg3[%c14_89, %c0_90], %299 {strides = array<i32>} : memref<16x32xf32, #tpu.memory_space<vmem>>, vector<2x32xf32>,
    %c0_91 = arith.constant 0 : index
    %c32_92 = arith.constant 32 : index
    %301 = vector.load %arg4[%c0_91, %c32_92] : memref<2x72xf32, #tpu.memory_space<vmem>>, vector<2x32xf32>
    tpu.vector_store %arg4[%c0_91, %c32_92], %299 {strides = array<i32>} : memref<2x72xf32, #tpu.memory_space<vmem>>, vector<2x32xf32>,
    %c0_93 = arith.constant 0 : index
    %c0_94 = arith.constant 0 : index
    %302 = vector.load %arg3[%c0_93, %c0_94] : memref<16x32xf32, #tpu.memory_space<vmem>>, vector<16x32xf32>
    %cst_95 = arith.constant dense<0.000000e+00> : vector<16xf32>
    %303 = vector.multi_reduction <add>, %302, %cst_95 [1] : vector<16x32xf32> to vector<16xf32>
    %304 = vector.shape_cast %303 : vector<16xf32> to vector<16x1xf32>
    %cst_96 = arith.constant 3.200000e+01 : f32
    %305 = vector.broadcast %cst_96 : f32 to vector<16x1xf32>
    %306 = arith.divf %304, %305 : vector<16x1xf32>
    %307 = vector.broadcast %306 : vector<16x1xf32> to vector<16x32xf32>
    %308 = arith.subf %302, %307 : vector<16x32xf32>
    %309 = arith.mulf %308, %308 : vector<16x32xf32>
    %cst_97 = arith.constant dense<0.000000e+00> : vector<16xf32>
    %310 = vector.multi_reduction <add>, %309, %cst_97 [1] : vector<16x32xf32> to vector<16xf32>
    %311 = vector.shape_cast %310 : vector<16xf32> to vector<16x1xf32>
    %cst_98 = arith.constant 3.200000e+01 : f32
    %312 = vector.broadcast %cst_98 : f32 to vector<16x1xf32>
    %313 = arith.divf %311, %312 : vector<16x1xf32>
    %314 = vector.broadcast %306 : vector<16x1xf32> to vector<16x32xf32>
    %315 = arith.subf %302, %314 : vector<16x32xf32>
    %cst_99 = arith.constant 9.99999974E-6 : f32
    %316 = vector.broadcast %cst_99 : f32 to vector<16x1xf32>
    %317 = arith.addf %313, %316 : vector<16x1xf32>
    %318 = math.rsqrt %317 : vector<16x1xf32>
    %319 = vector.broadcast %318 : vector<16x1xf32> to vector<16x32xf32>
    %320 = arith.mulf %315, %319 : vector<16x32xf32>
    %cst_100 = arith.constant dense<0.000000e+00> : vector<16x128xf32>
    %321 = tpu.matmul %320, %1, %cst_100 {dimension_numbers = #tpu.dot_dimension_numbers<[1], [0], [0], [1], [0, 0, 1, 1], [], []>} : vector<16x32xf32>, vector<32x128xf32>, vector<16x128xf32> -> vector<16x128xf32>
    %322 = vector.broadcast %2 : vector<1x128xf32> to vector<16x128xf32>
    %323 = arith.addf %321, %322 : vector<16x128xf32>
    %c0_101 = arith.constant 0 : index
    %c0_102 = arith.constant 0 : index
    %324 = vector.load %arg2[%c0_101, %c0_102] : memref<16x128xf32, #tpu.memory_space<vmem>>, vector<16x128xf32>
    tpu.vector_store %arg2[%c0_101, %c0_102], %323 {strides = array<i32>} : memref<16x128xf32, #tpu.memory_space<vmem>>, vector<16x128xf32>,
    return
  }
}

</mosaic_0001>

<llo_original>
// kernel: tpu_custom_call.1
$region0: #{tpu_custom_call.1}
  #allocation0 [shape = 'u32[]', space=smem, size = 0x4, offset = 0x4, fixed_abs, tag = 'smem constant byte address 0x4 - core index']
  #allocation1 [shape = 'u32[144,128]{1,0:T(1,128)}', space=vmem, size = 0x12000, scoped, tag = 'internal scratch']
  #allocation2 [shape = 'f32[16,32]{1,0:T(8,128)}', space=vmem, size = 0x2000, scoped, tag = 'scratch operand']
  #allocation3 [shape = 'f32[2,72]{1,0:T(2,128)}', space=vmem, size = 0x400, scoped, tag = 'scratch operand']
  %s0 = inlined_call_operand.hbm [shape: f32[16,128], index: 0, kind: input, shape index: {}]
  %s1 = inlined_call_operand.hbm [shape: f32[112,256], index: 1, kind: input, shape index: {}]
  %s2 = inlined_call_operand.hbm [shape: f32[16,128], index: 2, kind: output, shape index: {}]
  %s3 = sld [smem:[#allocation0]]
  $region26: #{tpu_custom_call.1} parent=0
    _
  %s5 = ssub.s32 1, %s3
  %s6 = scalar_select 0, %s5, %s3
  $region1: #{tpu_custom_call.1} parent=0
    #allocation4 [shape = 'u8[8192]{0}', space=vmem, size = 0x2000, scoped, tag = 'input window, operand 0, single buffered']
    #allocation5 [shape = 's32[1]{0}', space=sflag, size = 0x4, scoped, tag = 'scoped memory for tpu_custom_call.1']
    #allocation6 [shape = 's32[1]{0}', space=sflag, size = 0x4, scoped, tag = 'scoped memory for tpu_custom_call.1']
    #allocation7 [shape = 'u8[114688]{0}', space=vmem, size = 0x1c000, scoped, tag = 'input window, operand 1, single buffered']
    #allocation8 [shape = 's32[1]{0}', space=sflag, size = 0x4, scoped, tag = 'scoped memory for tpu_custom_call.1']
    #allocation9 [shape = 'u8[8192]{0}', space=vmem, size = 0x2000, scoped, tag = 'output window, operand 0, single buffered']
    %7 = vsyncpa [#allocation5], 0
    %8 = vsyncpa [#allocation8], 0
    %9 = vsyncpa [#allocation6], 0
    // Predicated region
    $region2: #{tpu_custom_call.1} parent=1 // pred_check
      _
    $region3: #{tpu_custom_call.1} parent=1 // pred_check_branch
      %11 = sbr.rel (0) target = $region5
    $region4: #{tpu_custom_call.1} parent=1 // pred_region
      %s13 = ssub.s32 256, 256
      %14 = vsyncadd [#allocation5], %s13
      %s15 = sshll.u32 [#allocation4], 4
      %s16 = int_to_ptr.vmem [resolvable:$true] %s15
      %21 = dma.hbm_to_vmem [thread:$0]  %s0, 256, %s16, [#allocation5], 128, 128, 8
    $region5: #{tpu_custom_call.1} parent=1 // pred_fallthru
      _
    // Predicated region
    $region6: #{tpu_custom_call.1} parent=1 // pred_check
      _
    $region7: #{tpu_custom_call.1} parent=1 // pred_check_branch
      %23 = sbr.rel (0) target = $region9
    $region8: #{tpu_custom_call.1} parent=1 // pred_region
      %s25 = ssub.s32 3584, 3584
      %26 = vsyncadd [#allocation8], %s25
      %s27 = sshll.u32 [#allocation7], 4
      %s28 = int_to_ptr.vmem [resolvable:$true] %s27
      %33 = dma.hbm_to_vmem [thread:$0]  %s1, 3584, %s28, [#allocation8], 256, 256, 16
    $region9: #{tpu_custom_call.1} parent=1 // pred_fallthru
      _
    // Predicated region
    $region10: #{tpu_custom_call.1} parent=1 // pred_check
      _
    $region11: #{tpu_custom_call.1} parent=1 // pred_check_branch
      %35 = sbr.rel (0) target = $region13
    $region12: #{tpu_custom_call.1} parent=1 // pred_region
      %36 = dma.done [#allocation5], 256
    $region13: #{tpu_custom_call.1} parent=1 // pred_fallthru
      _
    // Predicated region
    $region14: #{tpu_custom_call.1} parent=1 // pred_check
      _
    $region15: #{tpu_custom_call.1} parent=1 // pred_check_branch
      %38 = sbr.rel (0) target = $region17
    $region16: #{tpu_custom_call.1} parent=1 // pred_region
      %39 = dma.done [#allocation8], 3584
    $region17: #{tpu_custom_call.1} parent=1 // pred_fallthru
      _
    %v40 = vld [vmem:[#allocation7] sm:$0xff]
    %v41 = vld [vmem:[#allocation7 + $0x8] sm:$0xff]
    %v42 = vld [vmem:[#allocation7 + $0x10] sm:$0xff]
    %v43 = vld [vmem:[#allocation7 + $0x18] sm:$0xff]
    %v44 = vld [vmem:[#allocation7 + $0x20] sm:$0xff]
    %v45 = vld [vmem:[#allocation7 + $0x28] sm:$0xff]
    %v46 = vld [vmem:[#allocation7 + $0x30] sm:$0xff]
    %v47 = vld [vmem:[#allocation7 + $0x38] sm:$0xff]
    %v48 = vld [vmem:[#allocation7 + $0x40] sm:$0xff]
    %v49 = vld [vmem:[#allocation7 + $0x48] sm:$0xff]
    %v50 = vld [vmem:[#allocation7 + $0x50] sm:$0xff]
    %v51 = vld [vmem:[#allocation7 + $0x58] sm:$0xff]
    %v52 = vld [vmem:[#allocation7 + $0x60] sm:$0xff]
    %v53 = vld [vmem:[#allocation7 + $0x68] sm:$0xff]
    %v54 = vld [vmem:[#allocation7 + $0x70] sm:$0xff]
    %v55 = vld [vmem:[#allocation7 + $0x78] sm:$0xff]
    %v56 = vld [vmem:[#allocation7 + $0x80] sm:$0xff]
    %v57 = vld [vmem:[#allocation7 + $0x88] sm:$0xff]
    %v58 = vld [vmem:[#allocation7 + $0x90] sm:$0xff]
    %v59 = vld [vmem:[#allocation7 + $0xa0] sm:$0xff]
    %v60 = vld [vmem:[#allocation7 + $0xb0] sm:$0xff]
    %v61 = vld [vmem:[#allocation7 + $0xc0] sm:$0xff]
    %v62 = vld [vmem:[#allocation7 + $0xd0] ss:$0 sm:$0xff]
    %v63 = vlaneseq
    %v64 = vand.u32 %v63, 127
    %vm65 = vcmp.ge.s32.totalorder %v64, 64
    %vm66 = vcmp.lt.s32.totalorder %v64, 96
    %vm67 = vmand %vm65, %vm66
    %v68 = vsel %vm67, 1.0, 0.5
    %v69 = vsel %vm67, 0.0, 0.5
    %vm70 = vcmp.eq.s32.totalorder %v64, 64
    %v71 = vsel %vm70, 1.0, 0.0
    %vm72 = vcmask 582656
    %73 = vst.msk [vmem:[#allocation3] sm:$0x3] %vm72, %v71
    %v74 = vld [vmem:[#allocation4] sm:$0x3]
    %v75 = vmul.f32 %v74, %v68
    %v76 = vtanh.pop %v75
    %v77 = vmul.f32 %v76, %v68
    %v78 = vadd.f32 %v77, %v69
    %v79 = vmul.f32 %v78, 0.0
    %81 = vrot.lane.b32.xlu0 %v78, 64
    %v82 = vpop.permute.xlu0 %81
    %v84 = vmul.f32 %v78, %v82
    %86 = vrot.lane.b32.xlu0 %v84, 32
    %v87 = vpop.permute.xlu0 %86
    %v89 = vadd.f32 %v79, %v87
    %v90 = vtanh.pop %v89
    %92 = vrot.lane.b32.xlu0 %v90, 64
    %v93 = vpop.permute.xlu0 %92
    %v95 = vmul.f32 %v78, %v93
    %97 = vrot.lane.b32.xlu0 %v95, 32
    %v98 = vpop.permute.xlu0 %97
    %vm100 = vcmask 254976
    %101 = vst.msk [vmem:[#allocation3] sm:$0x3] %vm100, %v98
    %v102 = vld [vmem:[#allocation3] sm:$0x3]
    %vm103 = vcmask 588800
    %v105 = vsel %vm103, %v102, 0
    %107 = vmatprep.subr.mxu0 %v41
    %108 = vmatpush1.msra.mxu0 %v40
    %109 = vmatprep.subr.mxu0 %v43
    %110 = vmatpush1.msra.mxu0 %v42
    %111 = vmatprep.subr.mxu0 %v45
    %112 = vmatpush1.msra.mxu0 %v44
    %113 = vmatprep.subr.mxu0 %v47
    %114 = vmatpush1.msra.mxu0 %v46
    %115 = vmatprep.subr.mxu0 %v49
    %116 = vmatpush1.msra.mxu0 %v48
    %117 = vmatprep.subr.mxu0 %v51
    %118 = vmatpush1.msra.mxu0 %v50
    %119 = vmatprep.subr.mxu0 %v53
    %120 = vmatpush1.msra.mxu0 %v52
    %121 = vmatprep.subr.mxu0 %v55
    %122 = vmatpush1.msra.mxu0 %v54
    %123 = vmatprep.subr.mxu0 %v57
    %124 = vmatpush1.msra.mxu0 %v56
    %125 = vmatprep.subr.mxu0 0.0
    %126 = vmatpush1.msra.mxu0 0.0
    %127 = vmatprep.subr.mxu0 0.0
    %128 = vmatpush1.msra.mxu0 0.0
    %129 = vmatprep.subr.mxu0 0.0
    %130 = vmatpush1.msra.mxu0 0.0
    %131 = vmatprep.subr.mxu0 0.0
    %132 = vmatpush1.msra.mxu0 0.0
    %133 = vmatprep.subr.mxu0 0.0
    %134 = vmatpush1.msra.mxu0 0.0
    %135 = vmatprep.subr.mxu0 0.0
    %136 = vmatpush1.msra.mxu0 0.0
    %137 = vmatprep.subr.mxu0 0.0
    %138 = vmatpush1.msra.mxu0 0.0
    %139 = vmatprep.subr.mxu0 0.0
    %140 = vmatpush1.msra.mxu0 0.0
    %141 = vmatprep.subr.mxu0 0.0
    %142 = vmatpush1.msra.mxu0 0.0
    %143 = vmatprep.subr.mxu0 0.0
    %144 = vmatpush1.msra.mxu0 0.0
    %145 = vmatprep.subr.mxu0 0.0
    %146 = vmatpush1.msra.mxu0 0.0
    %147 = vmatprep.subr.mxu0 0.0
    %148 = vmatpush1.msra.mxu0 0.0
    %149 = vmatprep.subr.mxu0 0.0
    %150 = vmatpush1.msra.mxu0 0.0
    %151 = vmatprep.subr.mxu0 0.0
    %152 = vmatpush1.msra.mxu0 0.0
    %153 = vmatprep.subr.mxu0 0.0
    %154 = vmatpush1.msra.mxu0 0.0
    %155 = vmatprep.subr.mxu0 0.0
    %156 = vmatpush1.msra.mxu0 0.0
    %157 = vmatprep.subr.mxu0 0.0
    %158 = vmatpush1.msra.mxu0 0.0
    %159 = vmatprep.subr.mxu0 0.0
    %160 = vmatpush1.msra.mxu0 0.0
    %161 = vmatprep.subr.mxu0 0.0
    %162 = vmatpush1.msra.mxu0 0.0
    %163 = vmatprep.subr.mxu0 0.0
    %164 = vmatpush1.msra.mxu0 0.0
    %165 = vmatprep.subr.mxu0 0.0
    %166 = vmatpush1.msra.mxu0 0.0
    %167 = vmatprep.subr.mxu0 0.0
    %168 = vmatpush1.msra.mxu0 0.0
    %169 = vmatprep.subr.mxu0 0.0
    %170 = vmatpush1.msra.mxu0 0.0
    %171 = vmatprep.mubr.f32.mxu0 0.0
    %172 = vmatmul.mubr.f32.gmra.mrb[0].mxu0 %v105
    %v173 = vpop.f32.mrb[0].mxu0
    %v174 = vadd.f32 0.0, %v173
    %v175 = vpop.f32.mrb[0].mxu0
    %v176 = vadd.f32 0.0, %v175
    %177 = vdwg.mxu0
    %v178 = vmul.f32 %v174, %v68
    %v179 = vtanh.pop %v178
    %v180 = vmul.f32 %v179, %v68
    %v181 = vadd.f32 %v180, %v69
    %v182 = vmul.f32 %v181, 0.0
    %184 = vrot.lane.b32.xlu0 %v181, 64
    %v185 = vpop.permute.xlu0 %184
    %v187 = vmul.f32 %v181, %v185
    %189 = vrot.lane.b32.xlu0 %v187, 32
    %v190 = vpop.permute.xlu0 %189
    %v192 = vadd.f32 %v182, %v190
    %v193 = vtanh.pop %v192
    %195 = vrot.lane.b32.xlu0 %v193, 64
    %v196 = vpop.permute.xlu0 %195
    %v198 = vmul.f32 %v181, %v196
    %200 = vrot.lane.b32.xlu0 %v198, 32
    %v201 = vpop.permute.xlu0 %200
    %203 = vst.msk [vmem:[#allocation2] sm:$0x3] %vm100, %v201
    %204 = vrot.lane.b32.xlu0 %v198, 64
    %v205 = vpop.permute.xlu0 %204
    %vm207 = vcmask 517376
    %208 = vst.msk [vmem:[#allocation3] sm:$0x3] %vm207, %v205
    %v209 = vld [vmem:[#allocation4 + $0x2] sm:$0x3]
    %v210 = vadd.f32 %v209, %v176
    %v211 = vmul.f32 %v210, %v68
    %v212 = vtanh.pop %v211
    %v213 = vmul.f32 %v212, %v68
    %v214 = vadd.f32 %v213, %v69
    %v215 = vmul.f32 %v214, %v89
    %217 = vrot.lane.b32.xlu0 %v214, 64
    %v218 = vpop.permute.xlu0 %217
    %v220 = vmul.f32 %v214, %v218
    %222 = vrot.lane.b32.xlu0 %v220, 32
    %v223 = vpop.permute.xlu0 %222
    %v225 = vadd.f32 %v215, %v223
    %v226 = vtanh.pop %v225
    %228 = vrot.lane.b32.xlu0 %v226, 64
    %v229 = vpop.permute.xlu0 %228
    %v231 = vmul.f32 %v214, %v229
    %233 = vrot.lane.b32.xlu0 %v231, 32
    %v234 = vpop.permute.xlu0 %233
    %236 = vst.msk [vmem:[#allocation3] sm:$0x3] %vm100, %v234
    %v237 = vld [vmem:[#allocation3] sm:$0x3]
    %v239 = vsel %vm103, %v237, 0
    %241 = vmatprep.subr.mxu0 %v41
    %242 = vmatpush1.msra.mxu0 %v40
    %243 = vmatprep.subr.mxu0 %v43
    %244 = vmatpush1.msra.mxu0 %v42
    %245 = vmatprep.subr.mxu0 %v45
    %246 = vmatpush1.msra.mxu0 %v44
    %247 = vmatprep.subr.mxu0 %v47
    %248 = vmatpush1.msra.mxu0 %v46
    %249 = vmatprep.subr.mxu0 %v49
    %250 = vmatpush1.msra.mxu0 %v48
    %251 = vmatprep.subr.mxu0 %v51
    %252 = vmatpush1.msra.mxu0 %v50
    %253 = vmatprep.subr.mxu0 %v53
    %254 = vmatpush1.msra.mxu0 %v52
    %255 = vmatprep.subr.mxu0 %v55
    %256 = vmatpush1.msra.mxu0 %v54
    %257 = vmatprep.subr.mxu0 %v57
    %258 = vmatpush1.msra.mxu0 %v56
    %259 = vmatprep.subr.mxu0 0.0
    %260 = vmatpush1.msra.mxu0 0.0
    %261 = vmatprep.subr.mxu0 0.0
    %262 = vmatpush1.msra.mxu0 0.0
    %263 = vmatprep.subr.mxu0 0.0
    %264 = vmatpush1.msra.mxu0 0.0
    %265 = vmatprep.subr.mxu0 0.0
    %266 = vmatpush1.msra.mxu0 0.0
    %267 = vmatprep.subr.mxu0 0.0
    %268 = vmatpush1.msra.mxu0 0.0
    %269 = vmatprep.subr.mxu0 0.0
    %270 = vmatpush1.msra.mxu0 0.0
    %271 = vmatprep.subr.mxu0 0.0
    %272 = vmatpush1.msra.mxu0 0.0
    %273 = vmatprep.subr.mxu0 0.0
    %274 = vmatpush1.msra.mxu0 0.0
    %275 = vmatprep.subr.mxu0 0.0
    %276 = vmatpush1.msra.mxu0 0.0
    %277 = vmatprep.subr.mxu0 0.0
    %278 = vmatpush1.msra.mxu0 0.0
    %279 = vmatprep.subr.mxu0 0.0
    %280 = vmatpush1.msra.mxu0 0.0
    %281 = vmatprep.subr.mxu0 0.0
    %282 = vmatpush1.msra.mxu0 0.0
    %283 = vmatprep.subr.mxu0 0.0
    %284 = vmatpush1.msra.mxu0 0.0
    %285 = vmatprep.subr.mxu0 0.0
    %286 = vmatpush1.msra.mxu0 0.0
    %287 = vmatprep.subr.mxu0 0.0
    %288 = vmatpush1.msra.mxu0 0.0
    %289 = vmatprep.subr.mxu0 0.0
    %290 = vmatpush1.msra.mxu0 0.0
    %291 = vmatprep.subr.mxu0 0.0
    %292 = vmatpush1.msra.mxu0 0.0
    %293 = vmatprep.subr.mxu0 0.0
    %294 = vmatpush1.msra.mxu0 0.0
    %295 = vmatprep.subr.mxu0 0.0
    %296 = vmatpush1.msra.mxu0 0.0
    %297 = vmatprep.subr.mxu0 0.0
    %298 = vmatpush1.msra.mxu0 0.0
    %299 = vmatprep.subr.mxu0 0.0
    %300 = vmatpush1.msra.mxu0 0.0
    %301 = vmatprep.subr.mxu0 0.0
    %302 = vmatpush1.msra.mxu0 0.0
    %303 = vmatprep.subr.mxu0 0.0
    %304 = vmatpush1.msra.mxu0 0.0
    %305 = vmatprep.mubr.f32.mxu0 0.0
    %306 = vmatmul.mubr.f32.gmra.mrb[0].mxu0 %v239
    %v307 = vpop.f32.mrb[0].mxu0
    %v308 = vadd.f32 0.0, %v307
    %v309 = vpop.f32.mrb[0].mxu0
    %v310 = vadd.f32 0.0, %v309
    %311 = vdwg.mxu0
    %v312 = vmul.f32 %v308, %v68
    %v313 = vtanh.pop %v312
    %v314 = vmul.f32 %v313, %v68
    %v315 = vadd.f32 %v314, %v69
    %v316 = vmul.f32 %v315, %v192
    %318 = vrot.lane.b32.xlu0 %v315, 64
    %v319 = vpop.permute.xlu0 %318
    %v321 = vmul.f32 %v315, %v319
    %323 = vrot.lane.b32.xlu0 %v321, 32
    %v324 = vpop.permute.xlu0 %323
    %v326 = vadd.f32 %v316, %v324
    %v327 = vtanh.pop %v326
    %329 = vrot.lane.b32.xlu0 %v327, 64
    %v330 = vpop.permute.xlu0 %329
    %v332 = vmul.f32 %v315, %v330
    %334 = vrot.lane.b32.xlu0 %v332, 32
    %v335 = vpop.permute.xlu0 %334
    %337 = vst.msk [vmem:[#allocation2 + $0x2] sm:$0x3] %vm100, %v335
    %338 = vrot.lane.b32.xlu0 %v332, 64
    %v339 = vpop.permute.xlu0 %338
    %341 = vst.msk [vmem:[#allocation3] sm:$0x3] %vm207, %v339
    %v342 = vld [vmem:[#allocation4 + $0x4] sm:$0x3]
    %v343 = vadd.f32 %v342, %v310
    %v344 = vmul.f32 %v343, %v68
    %v345 = vtanh.pop %v344
    %v346 = vmul.f32 %v345, %v68
    %v347 = vadd.f32 %v346, %v69
    %v348 = vmul.f32 %v347, %v225
    %350 = vrot.lane.b32.xlu0 %v347, 64
    %v351 = vpop.permute.xlu0 %350
    %v353 = vmul.f32 %v347, %v351
    %355 = vrot.lane.b32.xlu0 %v353, 32
    %v356 = vpop.permute.xlu0 %355
    %v358 = vadd.f32 %v348, %v356
    %v359 = vtanh.pop %v358
    %361 = vrot.lane.b32.xlu0 %v359, 64
    %v362 = vpop.permute.xlu0 %361
    %v364 = vmul.f32 %v347, %v362
    %366 = vrot.lane.b32.xlu0 %v364, 32
    %v367 = vpop.permute.xlu0 %366
    %369 = vst.msk [vmem:[#allocation3] sm:$0x3] %vm100, %v367
    %v370 = vld [vmem:[#allocation3] sm:$0x3]
    %v372 = vsel %vm103, %v370, 0
    %374 = vmatprep.subr.mxu0 %v41
    %375 = vmatpush1.msra.mxu0 %v40
    %376 = vmatprep.subr.mxu0 %v43
    %377 = vmatpush1.msra.mxu0 %v42
    %378 = vmatprep.subr.mxu0 %v45
    %379 = vmatpush1.msra.mxu0 %v44
    %380 = vmatprep.subr.mxu0 %v47
    %381 = vmatpush1.msra.mxu0 %v46
    %382 = vmatprep.subr.mxu0 %v49
    %383 = vmatpush1.msra.mxu0 %v48
    %384 = vmatprep.subr.mxu0 %v51
    %385 = vmatpush1.msra.mxu0 %v50
    %386 = vmatprep.subr.mxu0 %v53
    %387 = vmatpush1.msra.mxu0 %v52
    %388 = vmatprep.subr.mxu0 %v55
    %389 = vmatpush1.msra.mxu0 %v54
    %390 = vmatprep.subr.mxu0 %v57
    %391 = vmatpush1.msra.mxu0 %v56
    %392 = vmatprep.subr.mxu0 0.0
    %393 = vmatpush1.msra.mxu0 0.0
    %394 = vmatprep.subr.mxu0 0.0
    %395 = vmatpush1.msra.mxu0 0.0
    %396 = vmatprep.subr.mxu0 0.0
    %397 = vmatpush1.msra.mxu0 0.0
    %398 = vmatprep.subr.mxu0 0.0
    %399 = vmatpush1.msra.mxu0 0.0
    %400 = vmatprep.subr.mxu0 0.0
    %401 = vmatpush1.msra.mxu0 0.0
    %402 = vmatprep.subr.mxu0 0.0
    %403 = vmatpush1.msra.mxu0 0.0
    %404 = vmatprep.subr.mxu0 0.0
    %405 = vmatpush1.msra.mxu0 0.0
    %406 = vmatprep.subr.mxu0 0.0
    %407 = vmatpush1.msra.mxu0 0.0
    %408 = vmatprep.subr.mxu0 0.0
    %409 = vmatpush1.msra.mxu0 0.0
    %410 = vmatprep.subr.mxu0 0.0
    %411 = vmatpush1.msra.mxu0 0.0
    %412 = vmatprep.subr.mxu0 0.0
    %413 = vmatpush1.msra.mxu0 0.0
    %414 = vmatprep.subr.mxu0 0.0
    %415 = vmatpush1.msra.mxu0 0.0
    %416 = vmatprep.subr.mxu0 0.0
    %417 = vmatpush1.msra.mxu0 0.0
    %418 = vmatprep.subr.mxu0 0.0
    %419 = vmatpush1.msra.mxu0 0.0
    %420 = vmatprep.subr.mxu0 0.0
    %421 = vmatpush1.msra.mxu0 0.0
    %422 = vmatprep.subr.mxu0 0.0
    %423 = vmatpush1.msra.mxu0 0.0
    %424 = vmatprep.subr.mxu0 0.0
    %425 = vmatpush1.msra.mxu0 0.0
    %426 = vmatprep.subr.mxu0 0.0
    %427 = vmatpush1.msra.mxu0 0.0
    %428 = vmatprep.subr.mxu0 0.0
    %429 = vmatpush1.msra.mxu0 0.0
    %430 = vmatprep.subr.mxu0 0.0
    %431 = vmatpush1.msra.mxu0 0.0
    %432 = vmatprep.subr.mxu0 0.0
    %433 = vmatpush1.msra.mxu0 0.0
    %434 = vmatprep.subr.mxu0 0.0
    %435 = vmatpush1.msra.mxu0 0.0
    %436 = vmatprep.subr.mxu0 0.0
    %437 = vmatpush1.msra.mxu0 0.0
    %438 = vmatprep.mubr.f32.mxu0 0.0
    %439 = vmatmul.mubr.f32.gmra.mrb[0].mxu0 %v372
    %v440 = vpop.f32.mrb[0].mxu0
    %v441 = vadd.f32 0.0, %v440
    %v442 = vpop.f32.mrb[0].mxu0
    %v443 = vadd.f32 0.0, %v442
    %444 = vdwg.mxu0
    %v445 = vmul.f32 %v441, %v68
    %v446 = vtanh.pop %v445
    %v447 = vmul.f32 %v446, %v68
    %v448 = vadd.f32 %v447, %v69
    %v449 = vmul.f32 %v448, %v326
    %451 = vrot.lane.b32.xlu0 %v448, 64
    %v452 = vpop.permute.xlu0 %451
    %v454 = vmul.f32 %v448, %v452
    %456 = vrot.lane.b32.xlu0 %v454, 32
    %v457 = vpop.permute.xlu0 %456
    %v459 = vadd.f32 %v449, %v457
    %v460 = vtanh.pop %v459
    %462 = vrot.lane.b32.xlu0 %v460, 64
    %v463 = vpop.permute.xlu0 %462
    %v465 = vmul.f32 %v448, %v463
    %467 = vrot.lane.b32.xlu0 %v465, 32
    %v468 = vpop.permute.xlu0 %467
    %470 = vst.msk [vmem:[#allocation2 + $0x4] sm:$0x3] %vm100, %v468
    %471 = vrot.lane.b32.xlu0 %v465, 64
    %v472 = vpop.permute.xlu0 %471
    %474 = vst.msk [vmem:[#allocation3] sm:$0x3] %vm207, %v472
    %v475 = vld [vmem:[#allocation4 + $0x6] sm:$0x3]
    %v476 = vadd.f32 %v475, %v443
    %v477 = vmul.f32 %v476, %v68
    %v478 = vtanh.pop %v477
    %v479 = vmul.f32 %v478, %v68
    %v480 = vadd.f32 %v479, %v69
    %v481 = vmul.f32 %v480, %v358
    %483 = vrot.lane.b32.xlu0 %v480, 64
    %v484 = vpop.permute.xlu0 %483
    %v486 = vmul.f32 %v480, %v484
    %488 = vrot.lane.b32.xlu0 %v486, 32
    %v489 = vpop.permute.xlu0 %488
    %v491 = vadd.f32 %v481, %v489
    %v492 = vtanh.pop %v491
    %494 = vrot.lane.b32.xlu0 %v492, 64
    %v495 = vpop.permute.xlu0 %494
    %v497 = vmul.f32 %v480, %v495
    %499 = vrot.lane.b32.xlu0 %v497, 32
    %v500 = vpop.permute.xlu0 %499
    %502 = vst.msk [vmem:[#allocation3] sm:$0x3] %vm100, %v500
    %v503 = vld [vmem:[#allocation3] sm:$0x3]
    %v505 = vsel %vm103, %v503, 0
    %507 = vmatprep.subr.mxu0 %v41
    %508 = vmatpush1.msra.mxu0 %v40
    %509 = vmatprep.subr.mxu0 %v43
    %510 = vmatpush1.msra.mxu0 %v42
    %511 = vmatprep.subr.mxu0 %v45
    %512 = vmatpush1.msra.mxu0 %v44
    %513 = vmatprep.subr.mxu0 %v47
    %514 = vmatpush1.msra.mxu0 %v46
    %515 = vmatprep.subr.mxu0 %v49
    %516 = vmatpush1.msra.mxu0 %v48
    %517 = vmatprep.subr.mxu0 %v51
    %518 = vmatpush1.msra.mxu0 %v50
    %519 = vmatprep.subr.mxu0 %v53
    %520 = vmatpush1.msra.mxu0 %v52
    %521 = vmatprep.subr.mxu0 %v55
    %522 = vmatpush1.msra.mxu0 %v54
    %523 = vmatprep.subr.mxu0 %v57
    %524 = vmatpush1.msra.mxu0 %v56
    %525 = vmatprep.subr.mxu0 0.0
    %526 = vmatpush1.msra.mxu0 0.0
    %527 = vmatprep.subr.mxu0 0.0
    %528 = vmatpush1.msra.mxu0 0.0
    %529 = vmatprep.subr.mxu0 0.0
    %530 = vmatpush1.msra.mxu0 0.0
    %531 = vmatprep.subr.mxu0 0.0
    %532 = vmatpush1.msra.mxu0 0.0
    %533 = vmatprep.subr.mxu0 0.0
    %534 = vmatpush1.msra.mxu0 0.0
    %535 = vmatprep.subr.mxu0 0.0
    %536 = vmatpush1.msra.mxu0 0.0
    %537 = vmatprep.subr.mxu0 0.0
    %538 = vmatpush1.msra.mxu0 0.0
    %539 = vmatprep.subr.mxu0 0.0
    %540 = vmatpush1.msra.mxu0 0.0
    %541 = vmatprep.subr.mxu0 0.0
    %542 = vmatpush1.msra.mxu0 0.0
    %543 = vmatprep.subr.mxu0 0.0
    %544 = vmatpush1.msra.mxu0 0.0
    %545 = vmatprep.subr.mxu0 0.0
    %546 = vmatpush1.msra.mxu0 0.0
    %547 = vmatprep.subr.mxu0 0.0
    %548 = vmatpush1.msra.mxu0 0.0
    %549 = vmatprep.subr.mxu0 0.0
    %550 = vmatpush1.msra.mxu0 0.0
    %551 = vmatprep.subr.mxu0 0.0
    %552 = vmatpush1.msra.mxu0 0.0
    %553 = vmatprep.subr.mxu0 0.0
    %554 = vmatpush1.msra.mxu0 0.0
    %555 = vmatprep.subr.mxu0 0.0
    %556 = vmatpush1.msra.mxu0 0.0
    %557 = vmatprep.subr.mxu0 0.0
    %558 = vmatpush1.msra.mxu0 0.0
    %559 = vmatprep.subr.mxu0 0.0
    %560 = vmatpush1.msra.mxu0 0.0
    %561 = vmatprep.subr.mxu0 0.0
    %562 = vmatpush1.msra.mxu0 0.0
    %563 = vmatprep.subr.mxu0 0.0
    %564 = vmatpush1.msra.mxu0 0.0
    %565 = vmatprep.subr.mxu0 0.0
    %566 = vmatpush1.msra.mxu0 0.0
    %567 = vmatprep.subr.mxu0 0.0
    %568 = vmatpush1.msra.mxu0 0.0
    %569 = vmatprep.subr.mxu0 0.0
    %570 = vmatpush1.msra.mxu0 0.0
    %571 = vmatprep.mubr.f32.mxu0 0.0
    %572 = vmatmul.mubr.f32.gmra.mrb[0].mxu0 %v505
    %v573 = vpop.f32.mrb[0].mxu0
    %v574 = vadd.f32 0.0, %v573
    %v575 = vpop.f32.mrb[0].mxu0
    %v576 = vadd.f32 0.0, %v575
    %577 = vdwg.mxu0
    %v578 = vmul.f32 %v574, %v68
    %v579 = vtanh.pop %v578
    %v580 = vmul.f32 %v579, %v68
    %v581 = vadd.f32 %v580, %v69
    %v582 = vmul.f32 %v581, %v459
    %584 = vrot.lane.b32.xlu0 %v581, 64
    %v585 = vpop.permute.xlu0 %584
    %v587 = vmul.f32 %v581, %v585
    %589 = vrot.lane.b32.xlu0 %v587, 32
    %v590 = vpop.permute.xlu0 %589
    %v592 = vadd.f32 %v582, %v590
    %v593 = vtanh.pop %v592
    %595 = vrot.lane.b32.xlu0 %v593, 64
    %v596 = vpop.permute.xlu0 %595
    %v598 = vmul.f32 %v581, %v596
    %600 = vrot.lane.b32.xlu0 %v598, 32
    %v601 = vpop.permute.xlu0 %600
    %603 = vst.msk [vmem:[#allocation2 + $0x6] sm:$0x3] %vm100, %v601
    %604 = vrot.lane.b32.xlu0 %v598, 64
    %v605 = vpop.permute.xlu0 %604
    %607 = vst.msk [vmem:[#allocation3] sm:$0x3] %vm207, %v605
    %v608 = vld [vmem:[#allocation4 + $0x8] sm:$0x3]
    %v609 = vadd.f32 %v608, %v576
    %v610 = vmul.f32 %v609, %v68
    %v611 = vtanh.pop %v610
    %v612 = vmul.f32 %v611, %v68
    %v613 = vadd.f32 %v612, %v69
    %v614 = vmul.f32 %v613, %v491
    %616 = vrot.lane.b32.xlu0 %v613, 64
    %v617 = vpop.permute.xlu0 %616
    %v619 = vmul.f32 %v613, %v617
    %621 = vrot.lane.b32.xlu0 %v619, 32
    %v622 = vpop.permute.xlu0 %621
    %v624 = vadd.f32 %v614, %v622
    %v625 = vtanh.pop %v624
    %627 = vrot.lane.b32.xlu0 %v625, 64
    %v628 = vpop.permute.xlu0 %627
    %v630 = vmul.f32 %v613, %v628
    %632 = vrot.lane.b32.xlu0 %v630, 32
    %v633 = vpop.permute.xlu0 %632
    %635 = vst.msk [vmem:[#allocation3] sm:$0x3] %vm100, %v633
    %v636 = vld [vmem:[#allocation3] sm:$0x3]
    %v638 = vsel %vm103, %v636, 0
    %640 = vmatprep.subr.mxu0 %v41
    %641 = vmatpush1.msra.mxu0 %v40
    %642 = vmatprep.subr.mxu0 %v43
    %643 = vmatpush1.msra.mxu0 %v42
    %644 = vmatprep.subr.mxu0 %v45
    %645 = vmatpush1.msra.mxu0 %v44
    %646 = vmatprep.subr.mxu0 %v47
    %647 = vmatpush1.msra.mxu0 %v46
    %648 = vmatprep.subr.mxu0 %v49
    %649 = vmatpush1.msra.mxu0 %v48
    %650 = vmatprep.subr.mxu0 %v51
    %651 = vmatpush1.msra.mxu0 %v50
    %652 = vmatprep.subr.mxu0 %v53
    %653 = vmatpush1.msra.mxu0 %v52
    %654 = vmatprep.subr.mxu0 %v55
    %655 = vmatpush1.msra.mxu0 %v54
    %656 = vmatprep.subr.mxu0 %v57
    %657 = vmatpush1.msra.mxu0 %v56
    %658 = vmatprep.subr.mxu0 0.0
    %659 = vmatpush1.msra.mxu0 0.0
    %660 = vmatprep.subr.mxu0 0.0
    %661 = vmatpush1.msra.mxu0 0.0
    %662 = vmatprep.subr.mxu0 0.0
    %663 = vmatpush1.msra.mxu0 0.0
    %664 = vmatprep.subr.mxu0 0.0
    %665 = vmatpush1.msra.mxu0 0.0
    %666 = vmatprep.subr.mxu0 0.0
    %667 = vmatpush1.msra.mxu0 0.0
    %668 = vmatprep.subr.mxu0 0.0
    %669 = vmatpush1.msra.mxu0 0.0
    %670 = vmatprep.subr.mxu0 0.0
    %671 = vmatpush1.msra.mxu0 0.0
    %672 = vmatprep.subr.mxu0 0.0
    %673 = vmatpush1.msra.mxu0 0.0
    %674 = vmatprep.subr.mxu0 0.0
    %675 = vmatpush1.msra.mxu0 0.0
    %676 = vmatprep.subr.mxu0 0.0
    %677 = vmatpush1.msra.mxu0 0.0
    %678 = vmatprep.subr.mxu0 0.0
    %679 = vmatpush1.msra.mxu0 0.0
    %680 = vmatprep.subr.mxu0 0.0
    %681 = vmatpush1.msra.mxu0 0.0
    %682 = vmatprep.subr.mxu0 0.0
    %683 = vmatpush1.msra.mxu0 0.0
    %684 = vmatprep.subr.mxu0 0.0
    %685 = vmatpush1.msra.mxu0 0.0
    %686 = vmatprep.subr.mxu0 0.0
    %687 = vmatpush1.msra.mxu0 0.0
    %688 = vmatprep.subr.mxu0 0.0
    %689 = vmatpush1.msra.mxu0 0.0
    %690 = vmatprep.subr.mxu0 0.0
    %691 = vmatpush1.msra.mxu0 0.0
    %692 = vmatprep.subr.mxu0 0.0
    %693 = vmatpush1.msra.mxu0 0.0
    %694 = vmatprep.subr.mxu0 0.0
    %695 = vmatpush1.msra.mxu0 0.0
    %696 = vmatprep.subr.mxu0 0.0
    %697 = vmatpush1.msra.mxu0 0.0
    %698 = vmatprep.subr.mxu0 0.0
    %699 = vmatpush1.msra.mxu0 0.0
    %700 = vmatprep.subr.mxu0 0.0
    %701 = vmatpush1.msra.mxu0 0.0
    %702 = vmatprep.subr.mxu0 0.0
    %703 = vmatpush1.msra.mxu0 0.0
    %704 = vmatprep.mubr.f32.mxu0 0.0
    %705 = vmatmul.mubr.f32.gmra.mrb[0].mxu0 %v638
    %v706 = vpop.f32.mrb[0].mxu0
    %v707 = vadd.f32 0.0, %v706
    %v708 = vpop.f32.mrb[0].mxu0
    %v709 = vadd.f32 0.0, %v708
    %710 = vdwg.mxu0
    %v711 = vmul.f32 %v707, %v68
    %v712 = vtanh.pop %v711
    %v713 = vmul.f32 %v712, %v68
    %v714 = vadd.f32 %v713, %v69
    %v715 = vmul.f32 %v714, %v592
    %717 = vrot.lane.b32.xlu0 %v714, 64
    %v718 = vpop.permute.xlu0 %717
    %v720 = vmul.f32 %v714, %v718
    %722 = vrot.lane.b32.xlu0 %v720, 32
    %v723 = vpop.permute.xlu0 %722
    %v725 = vadd.f32 %v715, %v723
    %v726 = vtanh.pop %v725
    %728 = vrot.lane.b32.xlu0 %v726, 64
    %v729 = vpop.permute.xlu0 %728
    %v731 = vmul.f32 %v714, %v729
    %733 = vrot.lane.b32.xlu0 %v731, 32
    %v734 = vpop.permute.xlu0 %733
    %736 = vst.msk [vmem:[#allocation2 + $0x8] sm:$0x3] %vm100, %v734
    %737 = vrot.lane.b32.xlu0 %v731, 64
    %v738 = vpop.permute.xlu0 %737
    %740 = vst.msk [vmem:[#allocation3] sm:$0x3] %vm207, %v738
    %v741 = vld [vmem:[#allocation4 + $0xa] sm:$0x3]
    %v742 = vadd.f32 %v741, %v709
    %v743 = vmul.f32 %v742, %v68
    %v744 = vtanh.pop %v743
    %v745 = vmul.f32 %v744, %v68
    %v746 = vadd.f32 %v745, %v69
    %v747 = vmul.f32 %v746, %v624
    %749 = vrot.lane.b32.xlu0 %v746, 64
    %v750 = vpop.permute.xlu0 %749
    %v752 = vmul.f32 %v746, %v750
    %754 = vrot.lane.b32.xlu0 %v752, 32
    %v755 = vpop.permute.xlu0 %754
    %v757 = vadd.f32 %v747, %v755
    %v758 = vtanh.pop %v757
    %760 = vrot.lane.b32.xlu0 %v758, 64
    %v761 = vpop.permute.xlu0 %760
    %v763 = vmul.f32 %v746, %v761
    %765 = vrot.lane.b32.xlu0 %v763, 32
    %v766 = vpop.permute.xlu0 %765
    %768 = vst.msk [vmem:[#allocation3] sm:$0x3] %vm100, %v766
    %v769 = vld [vmem:[#allocation3] sm:$0x3]
    %v771 = vsel %vm103, %v769, 0
    %773 = vmatprep.subr.mxu0 %v41
    %774 = vmatpush1.msra.mxu0 %v40
    %775 = vmatprep.subr.mxu0 %v43
    %776 = vmatpush1.msra.mxu0 %v42
    %777 = vmatprep.subr.mxu0 %v45
    %778 = vmatpush1.msra.mxu0 %v44
    %779 = vmatprep.subr.mxu0 %v47
    %780 = vmatpush1.msra.mxu0 %v46
    %781 = vmatprep.subr.mxu0 %v49
    %782 = vmatpush1.msra.mxu0 %v48
    %783 = vmatprep.subr.mxu0 %v51
    %784 = vmatpush1.msra.mxu0 %v50
    %785 = vmatprep.subr.mxu0 %v53
    %786 = vmatpush1.msra.mxu0 %v52
    %787 = vmatprep.subr.mxu0 %v55
    %788 = vmatpush1.msra.mxu0 %v54
    %789 = vmatprep.subr.mxu0 %v57
    %790 = vmatpush1.msra.mxu0 %v56
    %791 = vmatprep.subr.mxu0 0.0
    %792 = vmatpush1.msra.mxu0 0.0
    %793 = vmatprep.subr.mxu0 0.0
    %794 = vmatpush1.msra.mxu0 0.0
    %795 = vmatprep.subr.mxu0 0.0
    %796 = vmatpush1.msra.mxu0 0.0
    %797 = vmatprep.subr.mxu0 0.0
    %798 = vmatpush1.msra.mxu0 0.0
    %799 = vmatprep.subr.mxu0 0.0
    %800 = vmatpush1.msra.mxu0 0.0
    %801 = vmatprep.subr.mxu0 0.0
    %802 = vmatpush1.msra.mxu0 0.0
    %803 = vmatprep.subr.mxu0 0.0
    %804 = vmatpush1.msra.mxu0 0.0
    %805 = vmatprep.subr.mxu0 0.0
    %806 = vmatpush1.msra.mxu0 0.0
    %807 = vmatprep.subr.mxu0 0.0
    %808 = vmatpush1.msra.mxu0 0.0
    %809 = vmatprep.subr.mxu0 0.0
    %810 = vmatpush1.msra.mxu0 0.0
    %811 = vmatprep.subr.mxu0 0.0
    %812 = vmatpush1.msra.mxu0 0.0
    %813 = vmatprep.subr.mxu0 0.0
    %814 = vmatpush1.msra.mxu0 0.0
    %815 = vmatprep.subr.mxu0 0.0
    %816 = vmatpush1.msra.mxu0 0.0
    %817 = vmatprep.subr.mxu0 0.0
    %818 = vmatpush1.msra.mxu0 0.0
    %819 = vmatprep.subr.mxu0 0.0
    %820 = vmatpush1.msra.mxu0 0.0
    %821 = vmatprep.subr.mxu0 0.0
    %822 = vmatpush1.msra.mxu0 0.0
    %823 = vmatprep.subr.mxu0 0.0
    %824 = vmatpush1.msra.mxu0 0.0
    %825 = vmatprep.subr.mxu0 0.0
    %826 = vmatpush1.msra.mxu0 0.0
    %827 = vmatprep.subr.mxu0 0.0
    %828 = vmatpush1.msra.mxu0 0.0
    %829 = vmatprep.subr.mxu0 0.0
    %830 = vmatpush1.msra.mxu0 0.0
    %831 = vmatprep.subr.mxu0 0.0
    %832 = vmatpush1.msra.mxu0 0.0
    %833 = vmatprep.subr.mxu0 0.0
    %834 = vmatpush1.msra.mxu0 0.0
    %835 = vmatprep.subr.mxu0 0.0
    %836 = vmatpush1.msra.mxu0 0.0
    %837 = vmatprep.mubr.f32.mxu0 0.0
    %838 = vmatmul.mubr.f32.gmra.mrb[0].mxu0 %v771
    %v839 = vpop.f32.mrb[0].mxu0
    %v840 = vadd.f32 0.0, %v839
    %v841 = vpop.f32.mrb[0].mxu0
    %v842 = vadd.f32 0.0, %v841
    %843 = vdwg.mxu0
    %v844 = vmul.f32 %v840, %v68
    %v845 = vtanh.pop %v844
    %v846 = vmul.f32 %v845, %v68
    %v847 = vadd.f32 %v846, %v69
    %v848 = vmul.f32 %v847, %v725
    %850 = vrot.lane.b32.xlu0 %v847, 64
    %v851 = vpop.permute.xlu0 %850
    %v853 = vmul.f32 %v847, %v851
    %855 = vrot.lane.b32.xlu0 %v853, 32
    %v856 = vpop.permute.xlu0 %855
    %v858 = vadd.f32 %v848, %v856
    %v859 = vtanh.pop %v858
    %861 = vrot.lane.b32.xlu0 %v859, 64
    %v862 = vpop.permute.xlu0 %861
    %v864 = vmul.f32 %v847, %v862
    %866 = vrot.lane.b32.xlu0 %v864, 32
    %v867 = vpop.permute.xlu0 %866
    %869 = vst.msk [vmem:[#allocation2 + $0xa] sm:$0x3] %vm100, %v867
    %870 = vrot.lane.b32.xlu0 %v864, 64
    %v871 = vpop.permute.xlu0 %870
    %873 = vst.msk [vmem:[#allocation3] sm:$0x3] %vm207, %v871
    %v874 = vld [vmem:[#allocation4 + $0xc] sm:$0x3]
    %v875 = vadd.f32 %v874, %v842
    %v876 = vmul.f32 %v875, %v68
    %v877 = vtanh.pop %v876
    %v878 = vmul.f32 %v877, %v68
    %v879 = vadd.f32 %v878, %v69
    %v880 = vmul.f32 %v879, %v757
    %882 = vrot.lane.b32.xlu0 %v879, 64
    %v883 = vpop.permute.xlu0 %882
    %v885 = vmul.f32 %v879, %v883
    %887 = vrot.lane.b32.xlu0 %v885, 32
    %v888 = vpop.permute.xlu0 %887
    %v890 = vadd.f32 %v880, %v888
    %v891 = vtanh.pop %v890
    %893 = vrot.lane.b32.xlu0 %v891, 64
    %v894 = vpop.permute.xlu0 %893
    %v896 = vmul.f32 %v879, %v894
    %898 = vrot.lane.b32.xlu0 %v896, 32
    %v899 = vpop.permute.xlu0 %898
    %901 = vst.msk [vmem:[#allocation3] sm:$0x3] %vm100, %v899
    %v902 = vld [vmem:[#allocation3] sm:$0x3]
    %v904 = vsel %vm103, %v902, 0
    %906 = vmatprep.subr.mxu0 %v41
    %907 = vmatpush1.msra.mxu0 %v40
    %908 = vmatprep.subr.mxu0 %v43
    %909 = vmatpush1.msra.mxu0 %v42
    %910 = vmatprep.subr.mxu0 %v45
    %911 = vmatpush1.msra.mxu0 %v44
    %912 = vmatprep.subr.mxu0 %v47
    %913 = vmatpush1.msra.mxu0 %v46
    %914 = vmatprep.subr.mxu0 %v49
    %915 = vmatpush1.msra.mxu0 %v48
    %916 = vmatprep.subr.mxu0 %v51
    %917 = vmatpush1.msra.mxu0 %v50
    %918 = vmatprep.subr.mxu0 %v53
    %919 = vmatpush1.msra.mxu0 %v52
    %920 = vmatprep.subr.mxu0 %v55
    %921 = vmatpush1.msra.mxu0 %v54
    %922 = vmatprep.subr.mxu0 %v57
    %923 = vmatpush1.msra.mxu0 %v56
    %924 = vmatprep.subr.mxu0 0.0
    %925 = vmatpush1.msra.mxu0 0.0
    %926 = vmatprep.subr.mxu0 0.0
    %927 = vmatpush1.msra.mxu0 0.0
    %928 = vmatprep.subr.mxu0 0.0
    %929 = vmatpush1.msra.mxu0 0.0
    %930 = vmatprep.subr.mxu0 0.0
    %931 = vmatpush1.msra.mxu0 0.0
    %932 = vmatprep.subr.mxu0 0.0
    %933 = vmatpush1.msra.mxu0 0.0
    %934 = vmatprep.subr.mxu0 0.0
    %935 = vmatpush1.msra.mxu0 0.0
    %936 = vmatprep.subr.mxu0 0.0
    %937 = vmatpush1.msra.mxu0 0.0
    %938 = vmatprep.subr.mxu0 0.0
    %939 = vmatpush1.msra.mxu0 0.0
    %940 = vmatprep.subr.mxu0 0.0
    %941 = vmatpush1.msra.mxu0 0.0
    %942 = vmatprep.subr.mxu0 0.0
    %943 = vmatpush1.msra.mxu0 0.0
    %944 = vmatprep.subr.mxu0 0.0
    %945 = vmatpush1.msra.mxu0 0.0
    %946 = vmatprep.subr.mxu0 0.0
    %947 = vmatpush1.msra.mxu0 0.0
    %948 = vmatprep.subr.mxu0 0.0
    %949 = vmatpush1.msra.mxu0 0.0
    %950 = vmatprep.subr.mxu0 0.0
    %951 = vmatpush1.msra.mxu0 0.0
    %952 = vmatprep.subr.mxu0 0.0
    %953 = vmatpush1.msra.mxu0 0.0
    %954 = vmatprep.subr.mxu0 0.0
    %955 = vmatpush1.msra.mxu0 0.0
    %956 = vmatprep.subr.mxu0 0.0
    %957 = vmatpush1.msra.mxu0 0.0
    %958 = vmatprep.subr.mxu0 0.0
    %959 = vmatpush1.msra.mxu0 0.0
    %960 = vmatprep.subr.mxu0 0.0
    %961 = vmatpush1.msra.mxu0 0.0
    %962 = vmatprep.subr.mxu0 0.0
    %963 = vmatpush1.msra.mxu0 0.0
    %964 = vmatprep.subr.mxu0 0.0
    %965 = vmatpush1.msra.mxu0 0.0
    %966 = vmatprep.subr.mxu0 0.0
    %967 = vmatpush1.msra.mxu0 0.0
    %968 = vmatprep.subr.mxu0 0.0
    %969 = vmatpush1.msra.mxu0 0.0
    %970 = vmatprep.mubr.f32.mxu0 0.0
    %971 = vmatmul.mubr.f32.gmra.mrb[0].mxu0 %v904
    %v972 = vpop.f32.mrb[0].mxu0
    %v973 = vadd.f32 0.0, %v972
    %v974 = vpop.f32.mrb[0].mxu0
    %v975 = vadd.f32 0.0, %v974
    %976 = vdwg.mxu0
    %v977 = vmul.f32 %v973, %v68
    %v978 = vtanh.pop %v977
    %v979 = vmul.f32 %v978, %v68
    %v980 = vadd.f32 %v979, %v69
    %v981 = vmul.f32 %v980, %v858
    %983 = vrot.lane.b32.xlu0 %v980, 64
    %v984 = vpop.permute.xlu0 %983
    %v986 = vmul.f32 %v980, %v984
    %988 = vrot.lane.b32.xlu0 %v986, 32
    %v989 = vpop.permute.xlu0 %988
    %v991 = vadd.f32 %v981, %v989
    %v992 = vtanh.pop %v991
    %994 = vrot.lane.b32.xlu0 %v992, 64
    %v995 = vpop.permute.xlu0 %994
    %v997 = vmul.f32 %v980, %v995
    %999 = vrot.lane.b32.xlu0 %v997, 32
    %v1000 = vpop.permute.xlu0 %999
    %1002 = vst.msk [vmem:[#allocation2 + $0xc] sm:$0x3] %vm100, %v1000
    %1003 = vrot.lane.b32.xlu0 %v997, 64
    %v1004 = vpop.permute.xlu0 %1003
    %1006 = vst.msk [vmem:[#allocation3] sm:$0x3] %vm207, %v1004
    %v1007 = vld [vmem:[#allocation4 + $0xe] sm:$0x3]
    %v1008 = vadd.f32 %v1007, %v975
    %v1009 = vmul.f32 %v1008, %v68
    %v1010 = vtanh.pop %v1009
    %v1011 = vmul.f32 %v1010, %v68
    %v1012 = vadd.f32 %v1011, %v69
    %v1013 = vmul.f32 %v1012, %v890
    %1015 = vrot.lane.b32.xlu0 %v1012, 64
    %v1016 = vpop.permute.xlu0 %1015
    %v1018 = vmul.f32 %v1012, %v1016
    %1020 = vrot.lane.b32.xlu0 %v1018, 32
    %v1021 = vpop.permute.xlu0 %1020
    %v1023 = vadd.f32 %v1013, %v1021
    %v1024 = vtanh.pop %v1023
    %1026 = vrot.lane.b32.xlu0 %v1024, 64
    %v1027 = vpop.permute.xlu0 %1026
    %v1029 = vmul.f32 %v1012, %v1027
    %1031 = vrot.lane.b32.xlu0 %v1029, 32
    %v1032 = vpop.permute.xlu0 %1031
    %1034 = vst.msk [vmem:[#allocation3] sm:$0x3] %vm100, %v1032
    %v1035 = vld [vmem:[#allocation3] sm:$0x3]
    %v1037 = vsel %vm103, %v1035, 0
    %1039 = vmatprep.subr.mxu0 %v41
    %1040 = vmatpush1.msra.mxu0 %v40
    %1041 = vmatprep.subr.mxu0 %v43
    %1042 = vmatpush1.msra.mxu0 %v42
    %1043 = vmatprep.subr.mxu0 %v45
    %1044 = vmatpush1.msra.mxu0 %v44
    %1045 = vmatprep.subr.mxu0 %v47
    %1046 = vmatpush1.msra.mxu0 %v46
    %1047 = vmatprep.subr.mxu0 %v49
    %1048 = vmatpush1.msra.mxu0 %v48
    %1049 = vmatprep.subr.mxu0 %v51
    %1050 = vmatpush1.msra.mxu0 %v50
    %1051 = vmatprep.subr.mxu0 %v53
    %1052 = vmatpush1.msra.mxu0 %v52
    %1053 = vmatprep.subr.mxu0 %v55
    %1054 = vmatpush1.msra.mxu0 %v54
    %1055 = vmatprep.subr.mxu0 %v57
    %1056 = vmatpush1.msra.mxu0 %v56
    %1057 = vmatprep.subr.mxu0 0.0
    %1058 = vmatpush1.msra.mxu0 0.0
    %1059 = vmatprep.subr.mxu0 0.0
    %1060 = vmatpush1.msra.mxu0 0.0
    %1061 = vmatprep.subr.mxu0 0.0
    %1062 = vmatpush1.msra.mxu0 0.0
    %1063 = vmatprep.subr.mxu0 0.0
    %1064 = vmatpush1.msra.mxu0 0.0
    %1065 = vmatprep.subr.mxu0 0.0
    %1066 = vmatpush1.msra.mxu0 0.0
    %1067 = vmatprep.subr.mxu0 0.0
    %1068 = vmatpush1.msra.mxu0 0.0
    %1069 = vmatprep.subr.mxu0 0.0
    %1070 = vmatpush1.msra.mxu0 0.0
    %1071 = vmatprep.subr.mxu0 0.0
    %1072 = vmatpush1.msra.mxu0 0.0
    %1073 = vmatprep.subr.mxu0 0.0
    %1074 = vmatpush1.msra.mxu0 0.0
    %1075 = vmatprep.subr.mxu0 0.0
    %1076 = vmatpush1.msra.mxu0 0.0
    %1077 = vmatprep.subr.mxu0 0.0
    %1078 = vmatpush1.msra.mxu0 0.0
    %1079 = vmatprep.subr.mxu0 0.0
    %1080 = vmatpush1.msra.mxu0 0.0
    %1081 = vmatprep.subr.mxu0 0.0
    %1082 = vmatpush1.msra.mxu0 0.0
    %1083 = vmatprep.subr.mxu0 0.0
    %1084 = vmatpush1.msra.mxu0 0.0
    %1085 = vmatprep.subr.mxu0 0.0
    %1086 = vmatpush1.msra.mxu0 0.0
    %1087 = vmatprep.subr.mxu0 0.0
    %1088 = vmatpush1.msra.mxu0 0.0
    %1089 = vmatprep.subr.mxu0 0.0
    %1090 = vmatpush1.msra.mxu0 0.0
    %1091 = vmatprep.subr.mxu0 0.0
    %1092 = vmatpush1.msra.mxu0 0.0
    %1093 = vmatprep.subr.mxu0 0.0
    %1094 = vmatpush1.msra.mxu0 0.0
    %1095 = vmatprep.subr.mxu0 0.0
    %1096 = vmatpush1.msra.mxu0 0.0
    %1097 = vmatprep.subr.mxu0 0.0
    %1098 = vmatpush1.msra.mxu0 0.0
    %1099 = vmatprep.subr.mxu0 0.0
    %1100 = vmatpush1.msra.mxu0 0.0
    %1101 = vmatprep.subr.mxu0 0.0
    %1102 = vmatpush1.msra.mxu0 0.0
    %1103 = vmatprep.mubr.f32.mxu0 0.0
    %1104 = vmatmul.mubr.f32.gmra.mrb[0].mxu0 %v1037
    %v1105 = vpop.f32.mrb[0].mxu0
    %v1106 = vadd.f32 0.0, %v1105
    %v1107 = vpop.f32.mrb[0].mxu0
    %1108 = vdwg.mxu0
    %v1109 = vmul.f32 %v1106, %v68
    %v1110 = vtanh.pop %v1109
    %v1111 = vmul.f32 %v1110, %v68
    %v1112 = vadd.f32 %v1111, %v69
    %v1113 = vmul.f32 %v1112, %v991
    %1115 = vrot.lane.b32.xlu0 %v1112, 64
    %v1116 = vpop.permute.xlu0 %1115
    %v1118 = vmul.f32 %v1112, %v1116
    %1120 = vrot.lane.b32.xlu0 %v1118, 32
    %v1121 = vpop.permute.xlu0 %1120
    %v1123 = vadd.f32 %v1113, %v1121
    %v1124 = vtanh.pop %v1123
    %1126 = vrot.lane.b32.xlu0 %v1124, 64
    %v1127 = vpop.permute.xlu0 %1126
    %v1129 = vmul.f32 %v1112, %v1127
    %1131 = vrot.lane.b32.xlu0 %v1129, 32
    %v1132 = vpop.permute.xlu0 %1131
    %1134 = vst.msk [vmem:[#allocation2 + $0xe] sm:$0x3] %vm100, %v1132
    %1135 = vrot.lane.b32.xlu0 %v1129, 64
    %v1136 = vpop.permute.xlu0 %1135
    %1138 = vst.msk [vmem:[#allocation3] sm:$0x3] %vm207, %v1136
    %v1139 = vld [vmem:[#allocation2] sm:$0xff]
    %v1140 = vld [vmem:[#allocation2 + $0x8] sm:$0xff]
    %vm1141 = vcmask 261120
    %v1142 = vsel %vm1141, %v1139, 0.0
    %1143 = vadd.xlane.f32.xlu0 %v1142
    %v1144 = vpop.xlane.xlu0 %1143
    %v1145 = vsel %vm1141, %v1140, 0.0
    %1146 = vadd.xlane.f32.xlu0 %v1145
    %v1147 = vpop.xlane.xlu0 %1146
    %v1148 = vrcp.pop 32.0
    %v1149 = vmul.f32 %v1144, %v1148
    %v1150 = vmul.f32 %v1147, %v1148
    %v1151 = vsub.f32 %v1139, %v1149
    %v1152 = vsub.f32 %v1140, %v1150
    %v1153 = vmul.f32 %v1151, %v1151
    %v1154 = vmul.f32 %v1152, %v1152
    %v1155 = vsel %vm1141, %v1153, 0.0
    %1156 = vadd.xlane.f32.xlu0 %v1155
    %v1157 = vpop.xlane.xlu0 %1156
    %v1158 = vsel %vm1141, %v1154, 0.0
    %1159 = vadd.xlane.f32.xlu0 %v1158
    %v1160 = vpop.xlane.xlu0 %1159
    %v1161 = vmul.f32 %v1157, %v1148
    %v1162 = vmul.f32 %v1160, %v1148
    %v1163 = vadd.f32 %v1161, 1e-05
    %v1164 = vadd.f32 %v1162, 1e-05
    %v1165 = vrsqrt.pop %v1163
    %v1166 = vrsqrt.pop %v1164
    %v1167 = vmul.f32 %v1151, %v1165
    %v1168 = vmul.f32 %v1152, %v1166
    %v1170 = vsel %vm1141, %v1167, 0
    %v1173 = vsel %vm1141, %v1168, 0
    %1175 = vmatprep.subr.mxu0 0.0
    %1176 = vmatpush1.msra.mxu0 %v58
    %1177 = vmatprep.subr.mxu0 0.0
    %1178 = vmatpush1.msra.mxu0 %v59
    %1179 = vmatprep.subr.mxu0 0.0
    %1180 = vmatpush1.msra.mxu0 %v60
    %1181 = vmatprep.subr.mxu0 0.0
    %1182 = vmatpush1.msra.mxu0 %v61
    %1183 = vmatprep.subr.mxu0 0.0
    %1184 = vmatpush1.msra.mxu0 0.0
    %1185 = vmatprep.subr.mxu0 0.0
    %1186 = vmatpush1.msra.mxu0 0.0
    %1187 = vmatprep.subr.mxu0 0.0
    %1188 = vmatpush1.msra.mxu0 0.0
    %1189 = vmatprep.subr.mxu0 0.0
    %1190 = vmatpush1.msra.mxu0 0.0
    %1191 = vmatprep.subr.mxu0 0.0
    %1192 = vmatpush1.msra.mxu0 0.0
    %1193 = vmatprep.subr.mxu0 0.0
    %1194 = vmatpush1.msra.mxu0 0.0
    %1195 = vmatprep.subr.mxu0 0.0
    %1196 = vmatpush1.msra.mxu0 0.0
    %1197 = vmatprep.subr.mxu0 0.0
    %1198 = vmatpush1.msra.mxu0 0.0
    %1199 = vmatprep.subr.mxu0 0.0
    %1200 = vmatpush1.msra.mxu0 0.0
    %1201 = vmatprep.subr.mxu0 0.0
    %1202 = vmatpush1.msra.mxu0 0.0
    %1203 = vmatprep.subr.mxu0 0.0
    %1204 = vmatpush1.msra.mxu0 0.0
    %1205 = vmatprep.subr.mxu0 0.0
    %1206 = vmatpush1.msra.mxu0 0.0
    %1207 = vmatprep.subr.mxu0 0.0
    %1208 = vmatpush1.msra.mxu0 0.0
    %1209 = vmatprep.subr.mxu0 0.0
    %1210 = vmatpush1.msra.mxu0 0.0
    %1211 = vmatprep.subr.mxu0 0.0
    %1212 = vmatpush1.msra.mxu0 0.0
    %1213 = vmatprep.subr.mxu0 0.0
    %1214 = vmatpush1.msra.mxu0 0.0
    %1215 = vmatprep.subr.mxu0 0.0
    %1216 = vmatpush1.msra.mxu0 0.0
    %1217 = vmatprep.subr.mxu0 0.0
    %1218 = vmatpush1.msra.mxu0 0.0
    %1219 = vmatprep.subr.mxu0 0.0
    %1220 = vmatpush1.msra.mxu0 0.0
    %1221 = vmatprep.subr.mxu0 0.0
    %1222 = vmatpush1.msra.mxu0 0.0
    %1223 = vmatprep.subr.mxu0 0.0
    %1224 = vmatpush1.msra.mxu0 0.0
    %1225 = vmatprep.subr.mxu0 0.0
    %1226 = vmatpush1.msra.mxu0 0.0
    %1227 = vmatprep.subr.mxu0 0.0
    %1228 = vmatpush1.msra.mxu0 0.0
    %1229 = vmatprep.subr.mxu0 0.0
    %1230 = vmatpush1.msra.mxu0 0.0
    %1231 = vmatprep.subr.mxu0 0.0
    %1232 = vmatpush1.msra.mxu0 0.0
    %1233 = vmatprep.subr.mxu0 0.0
    %1234 = vmatpush1.msra.mxu0 0.0
    %1235 = vmatprep.subr.mxu0 0.0
    %1236 = vmatpush1.msra.mxu0 0.0
    %1237 = vmatprep.subr.mxu0 0.0
    %1238 = vmatpush1.msra.mxu0 0.0
    %1239 = vmatprep.mubr.f32.mxu0 0.0
    %1240 = vmatmul.mubr.f32.gmra.mrb[0].mxu0 %v1170
    %v1241 = vpop.f32.mrb[0].mxu0
    %v1242 = vadd.f32 %v62, %v1241
    %v1243 = vpop.f32.mrb[0].mxu0
    %1244 = vmatprep.mubr.f32.mxu0 0.0
    %1245 = vmatmul.mubr.f32.gmra.mrb[0].mxu0 %v1173
    %v1246 = vpop.f32.mrb[0].mxu0
    %v1247 = vadd.f32 %v62, %v1246
    %v1248 = vpop.f32.mrb[0].mxu0
    %1249 = vdwg.mxu0
    %1250 = vst [vmem:[#allocation9] sm:$0xff] %v1242
    %1251 = vst [vmem:[#allocation9 + $0x8] sm:$0xff] %v1247
    // Predicated region
    $region18: #{tpu_custom_call.1} parent=1 // pred_check
      _
    $region19: #{tpu_custom_call.1} parent=1 // pred_check_branch
      %1253 = sbr.rel (0) target = $region21
    $region20: #{tpu_custom_call.1} parent=1 // pred_region
      %s1255 = ssub.s32 256, 256
      %1256 = vsyncadd [#allocation6], %s1255
      %s1257 = sshll.u32 [#allocation9], 4
      %s1258 = int_to_ptr.vmem [resolvable:$true] %s1257
      %1263 = dma.vmem_to_hbm [thread:$0]  %s1258, 256, %s2, [#allocation6], 128, 128, 8
    $region21: #{tpu_custom_call.1} parent=1 // pred_fallthru
      _
    // Predicated region
    $region22: #{tpu_custom_call.1} parent=1 // pred_check
      _
    $region23: #{tpu_custom_call.1} parent=1 // pred_check_branch
      %1265 = sbr.rel (0) target = $region25
    $region24: #{tpu_custom_call.1} parent=1 // pred_region
      %1266 = dma.done [#allocation6], 256
    $region25: #{tpu_custom_call.1} parent=1 // pred_fallthru
      _
    %1267 = vsyncpa [#allocation5], 1
    %1268 = vsyncpa [#allocation8], 1
    %1269 = vsyncpa [#allocation6], 1

</llo_original>
